<compile_context>
chip_gen: v7x
topology: tpu7x:2x2x1
jax: 0.10.0
libtpu: 0.0.40
codegen_flags: <defaults>
</compile_context>

<pallas_src>
import functools

import jax
import jax.numpy as jnp
from jax.experimental import pallas as pl
from jax.experimental.pallas import tpu as pltpu

LANE = 128                  # lane width: pad C_out to a multiple of this
MXU_DTYPE = jnp.bfloat16    # matmul-input / intermediate-activation dtype
TILE_M_CAP = 2048           # rows per grid step (multiple of 16); VMEM-safe
BN_EPS = 1e-5               # PyTorch BatchNorm2d default


def _round_up(x, m):
    return (x + m - 1) // m * m


# ----------------------------- Pallas kernels ------------------------------ #

def _apply_act(y, act):
    """Activation in f32 (VPU/EUP); caller casts at the store."""
    if act == "leaky":
        return jnp.where(y > 0, y, 0.2 * y)
    if act == "sigmoid":
        # Numerically-stable sigmoid: exp on EUP, approx reciprocal on EUP slot.
        z = jnp.exp(-jnp.abs(y))
        num = jnp.where(y >= 0, 1.0, z)
        return jnp.minimum(num * pl.reciprocal(1.0 + z, approx=True), 1.0)
    return y


def _conv_act_kernel(p_ref, w_ref, o_ref, *, act):
    """One M-tile: (TM, K) @ (K, Cp) on the MXU + fused activation (no BN)."""
    y = jnp.dot(p_ref[...], w_ref[...], preferred_element_type=jnp.float32)
    o_ref[...] = _apply_act(y, act).astype(o_ref.dtype)


def _conv_bn_act_kernel(p_ref, w_ref, g_ref, b_ref, o_ref, *, inv_m):
    """Fully fused conv + training-mode BatchNorm + LeakyReLU (single M tile).

    Padded rows / padded channel columns are zero, so they contribute nothing
    to the channel sums; dividing by the *true* M (baked-in 1/M) gives exact
    batch statistics.  Padded gamma columns are zero, so fake channels stay 0.
    """
    y = jnp.dot(p_ref[...], w_ref[...], preferred_element_type=jnp.float32)
    s = jnp.sum(y, axis=0, keepdims=True)          # (1, Cp)
    sq = jnp.sum(y * y, axis=0, keepdims=True)     # (1, Cp)
    mean = s * inv_m
    var = jnp.maximum(sq * inv_m - mean * mean, 0.0)   # biased var (training BN)
    scale = g_ref[...] * jax.lax.rsqrt(var + BN_EPS)
    shift = b_ref[...] - mean * scale
    y = y * scale + shift
    o_ref[...] = jnp.where(y > 0, y, 0.2 * y).astype(o_ref.dtype)


def _matmul_stats_kernel(p_ref, w_ref, y_ref, stats_ref):
    """BN pass 1 (multi-tile fallback): matmul tile + per-tile channel stats."""
    y = jnp.dot(p_ref[...], w_ref[...], preferred_element_type=jnp.float32)
    y_ref[...] = y.astype(y_ref.dtype)             # bf16 intermediate
    stats_ref[...] = jnp.concatenate(
        [jnp.sum(y, axis=0, keepdims=True),
         jnp.sum(y * y, axis=0, keepdims=True)], axis=0)     # (2, Cp)


def _bn_act_kernel(y_ref, stats_ref, g_ref, b_ref, o_ref, *, inv_m):
    """BN pass 2 (multi-tile fallback): finalize stats in-kernel + normalize + act."""
    st = stats_ref[...]                                       # (nt, 2, Cp) f32
    mean = jnp.sum(st[:, 0, :], axis=0, keepdims=True) * inv_m
    msq = jnp.sum(st[:, 1, :], axis=0, keepdims=True) * inv_m
    var = jnp.maximum(msq - mean * mean, 0.0)
    scale = g_ref[...] * jax.lax.rsqrt(var + BN_EPS)
    shift = b_ref[...] - mean * scale
    y = y_ref[...].astype(jnp.float32) * scale + shift
    o_ref[...] = jnp.where(y > 0, y, 0.2 * y).astype(o_ref.dtype)


# ------------------------------ Pallas wrappers ----------------------------- #

def _conv_act(patches, w_t, act, tm, out_dtype):
    Mp, K = patches.shape
    Cp = w_t.shape[1]
    kernel = functools.partial(_conv_act_kernel, act=act)
    return pl.pallas_call(
        kernel,
        out_shape=jax.ShapeDtypeStruct((Mp, Cp), out_dtype),
        grid=(Mp // tm,),
        in_specs=[
            pl.BlockSpec((tm, K), lambda i: (i, 0)),       # patches tile
            pl.BlockSpec((K, Cp), lambda i: (0, 0)),       # weights resident
        ],
        out_specs=pl.BlockSpec((tm, Cp), lambda i: (i, 0)),
        compiler_params=pltpu.CompilerParams(
            dimension_semantics=("parallel",)),
    )(patches, w_t)


def _conv_bn_act_fused(patches, w_t, g, b, true_m, out_dtype):
    """Single-tile fused conv+BN+act: whole problem in one kernel invocation."""
    Mp, _ = patches.shape
    Cp = w_t.shape[1]
    kernel = functools.partial(_conv_bn_act_kernel, inv_m=1.0 / true_m)
    return pl.pallas_call(
        kernel,
        out_shape=jax.ShapeDtypeStruct((Mp, Cp), out_dtype),
    )(patches, w_t, g, b)


def _conv_stats(patches, w_t, tm):
    Mp, K = patches.shape
    Cp = w_t.shape[1]
    nt = Mp // tm
    return pl.pallas_call(
        _matmul_stats_kernel,
        out_shape=(jax.ShapeDtypeStruct((Mp, Cp), MXU_DTYPE),
                   jax.ShapeDtypeStruct((nt, 2, Cp), jnp.float32)),
        grid=(nt,),
        in_specs=[
            pl.BlockSpec((tm, K), lambda i: (i, 0)),
            pl.BlockSpec((K, Cp), lambda i: (0, 0)),
        ],
        out_specs=(pl.BlockSpec((tm, Cp), lambda i: (i, 0)),
                   pl.BlockSpec((None, 2, Cp), lambda i: (i, 0, 0))),
        compiler_params=pltpu.CompilerParams(
            dimension_semantics=("parallel",)),
    )(patches, w_t)


def _bn_act(y, stats, g, b, true_m, tm, out_dtype):
    Mp, Cp = y.shape
    nt = stats.shape[0]
    kernel = functools.partial(_bn_act_kernel, inv_m=1.0 / true_m)
    return pl.pallas_call(
        kernel,
        out_shape=jax.ShapeDtypeStruct((Mp, Cp), out_dtype),
        grid=(Mp // tm,),
        in_specs=[
            pl.BlockSpec((tm, Cp), lambda i: (i, 0)),
            pl.BlockSpec((nt, 2, Cp), lambda i: (0, 0, 0)),  # tiny, resident
            pl.BlockSpec((1, Cp), lambda i: (0, 0)),
            pl.BlockSpec((1, Cp), lambda i: (0, 0)),
        ],
        out_specs=pl.BlockSpec((tm, Cp), lambda i: (i, 0)),
        compiler_params=pltpu.CompilerParams(
            dimension_semantics=("parallel",)),
    )(y, stats, g, b)


# --------------------------------- JAX glue --------------------------------- #

def extract_patches_nhwc(x, k, stride, pad):
    """x: (N, H, W, C) -> patches (N*Ho*Wo, C*k*k), Ho, Wo.

    Single fused XLA op (identity conv).  Flattened K ordering is channel-major
    (C_in, kh, kw); weights are reshaped to match in _prep_weight.  Channels
    stay on the fast (lane) axis, no transposes needed.
    """
    N = x.shape[0]
    p = jax.lax.conv_general_dilated_patches(
        x, filter_shape=(k, k), window_strides=(stride, stride),
        padding=((pad, pad), (pad, pad)),
        dimension_numbers=("NHWC", "HWIO", "NHWC"))
    _, Ho, Wo, K = p.shape
    return p.reshape(N * Ho * Wo, K), Ho, Wo


def _prep_weight(w):
    """(C_out, C_in, kh, kw) -> (C_in*kh*kw, C_out padded to 128 lanes), bf16."""
    c_out, c_in, kh, kw = w.shape
    w_t = jnp.transpose(w, (1, 2, 3, 0)).reshape(c_in * kh * kw, c_out)
    cp = _round_up(c_out, LANE)
    return jnp.pad(w_t, ((0, 0), (0, cp - c_out))).astype(MXU_DTYPE)


def conv_block(x, w, gamma=None, beta=None, *, stride, pad, use_bn, act,
               out_dtype=MXU_DTYPE):
    """x: NHWC (N, H, W, C_in), w: (C_out, C_in, k, k) -> NHWC (N, Ho, Wo, C_out)."""
    N = x.shape[0]
    c_out, _, k, _ = w.shape
    patches, Ho, Wo = extract_patches_nhwc(x, k, stride, pad)
    M, K = patches.shape

    tm = min(TILE_M_CAP, _round_up(M, 16))
    Mp = _round_up(M, tm)
    cp = _round_up(c_out, LANE)

    patches = jnp.pad(patches, ((0, Mp - M), (0, 0))).astype(MXU_DTYPE)
    w_t = _prep_weight(w)                          # (K, cp) bf16

    if not use_bn:
        y = _conv_act(patches, w_t, act, tm, out_dtype)
    else:
        g = jnp.pad(gamma, (0, cp - c_out)).reshape(1, cp)
        b = jnp.pad(beta, (0, cp - c_out)).reshape(1, cp)
        if Mp == tm:
            # Everything fits one tile: single fully-fused kernel, no HBM
            # round trip for y, no stats finalize glue.
            y = _conv_bn_act_fused(patches, w_t, g, b, M, out_dtype)
        else:
            # Large-M fallback: two passes, stats finalized inside pass 2.
            y, stats = _conv_stats(patches, w_t, tm)
            y = _bn_act(y, stats, g, b, M, tm, out_dtype)

    return y[:M, :c_out].reshape(N, Ho, Wo, c_out)


def init_params(key, ndf):
    k1, k2, k3, k4 = jax.random.split(key, 4)
    std = 0.02  # DCGAN-style init
    return {
        "w1": jax.random.normal(k1, (ndf, 1, 4, 4), jnp.float32) * std,
        "w2": jax.random.normal(k2, (ndf * 2, ndf, 4, 4), jnp.float32) * std,
        "w3": jax.random.normal(k3, (ndf * 4, ndf * 2, 4, 4), jnp.float32) * std,
        "w4": jax.random.normal(k4, (1, ndf * 4, 4, 4), jnp.float32) * std,
        # BatchNorm affine params (PyTorch default: weight=1, bias=0)
        "g2": jnp.ones((ndf * 2,), jnp.float32),
        "b2": jnp.zeros((ndf * 2,), jnp.float32),
        "g3": jnp.ones((ndf * 4,), jnp.float32),
        "b3": jnp.zeros((ndf * 4,), jnp.float32),
    }


def discriminator_forward(params, x):
    # PyTorch NCHW f32 input -> NHWC bf16 once; all layers stay NHWC / bf16.
    h = jnp.transpose(x, (0, 2, 3, 1)).astype(MXU_DTYPE)
    h = conv_block(h, params["w1"], stride=2, pad=1, use_bn=False, act="leaky")
    h = conv_block(h, params["w2"], params["g2"], params["b2"],
                   stride=2, pad=1, use_bn=True, act="leaky")
    h = conv_block(h, params["w3"], params["g3"], params["b3"],
                   stride=2, pad=1, use_bn=True, act="leaky")
    h = conv_block(h, params["w4"], stride=1, pad=0, use_bn=False,
                   act="sigmoid", out_dtype=jnp.float32)
    return jnp.transpose(h, (0, 3, 1, 2))          # (N, 1, 1, 1) f32


# Pure-XLA f32 reference (training-mode BN) for an in-script correctness check.
def _reference_forward(params, x):
    def conv(h, w, stride, pad):
        return jax.lax.conv_general_dilated(
            h, jnp.transpose(w, (2, 3, 1, 0)),            # OIHW -> HWIO
            (stride, stride), ((pad, pad), (pad, pad)),
            dimension_numbers=("NHWC", "HWIO", "NHWC"))

    def bn(y, g, b):
        mean = jnp.mean(y, axis=(0, 1, 2))
        var = jnp.var(y, axis=(0, 1, 2))                  # biased, training BN
        return (y - mean) * jax.lax.rsqrt(var + BN_EPS) * g + b

    lrelu = lambda v: jnp.where(v > 0, v, 0.2 * v)
    h = jnp.transpose(x, (0, 2, 3, 1))
    h = lrelu(conv(h, params["w1"], 2, 1))
    h = lrelu(bn(conv(h, params["w2"], 2, 1), params["g2"], params["b2"]))
    h = lrelu(bn(conv(h, params["w3"], 2, 1), params["g3"], params["b3"]))
    h = jax.nn.sigmoid(conv(h, params["w4"], 1, 0))
    return jnp.transpose(h, (0, 3, 1, 2))


if __name__ == "__main__":
    img_size = 32
    ndf = 8
    batch = 2

    key = jax.random.PRNGKey(0)
    kx, kp = jax.random.split(key)
    x = jax.random.normal(kx, (batch, 1, img_size, img_size), jnp.float32)
    params = init_params(kp, ndf)

    out = jax.jit(discriminator_forward)(params, x)
    out = jax.block_until_ready(out)

    assert out.shape == (batch, 1, 1, 1), out.shape
    assert bool(jnp.all(jnp.isfinite(out)))
    assert bool(jnp.all((out >= 0.0) & (out <= 1.0)))

    # Cross-check against the pure-XLA f32 reference (tolerance covers bf16
    # matmul inputs + approx-reciprocal sigmoid).
    ref = jax.block_until_ready(jax.jit(_reference_forward)(params, x))
    max_err = float(jnp.max(jnp.abs(out - ref)))
    assert max_err < 3e-2, f"max |pallas - ref| = {max_err}"

    print("KERNEL_OK")
</pallas_src>

<mosaic_0001>
module attributes {stable_mosaic.version = 11 : i64} {
  func.func @_conv_act_kernel(%arg0: i32, %arg1: memref<512x16xbf16, #tpu.memory_space<vmem>>, %arg2: memref<16x128xbf16, #tpu.memory_space<vmem>>, %arg3: memref<512x128xbf16, #tpu.memory_space<vmem>>) attributes {dimension_semantics = [#tpu.dimension_semantics<parallel>], iteration_bounds = array<i64: 1>, scalar_prefetch = 0 : i64, scratch_operands = 0 : i64, tpu.core_type = #tpu.core_type<tc>, window_params = [{transform_indices = @transform_0, window_bounds = array<i64: 512, 16>}, {pipeline_mode = #tpu.pipeline_mode<synchronous>, transform_indices = @transform_1, window_bounds = array<i64: 16, 128>}, {transform_indices = @transform_2, window_bounds = array<i64: 512, 128>}]} {
    %c0 = arith.constant 0 : index
    %c0_0 = arith.constant 0 : index
    %0 = vector.load %arg1[%c0, %c0_0] : memref<512x16xbf16, #tpu.memory_space<vmem>>, vector<512x16xbf16>
    %c0_1 = arith.constant 0 : index
    %c0_2 = arith.constant 0 : index
    %1 = vector.load %arg2[%c0_1, %c0_2] : memref<16x128xbf16, #tpu.memory_space<vmem>>, vector<16x128xbf16>
    %cst = arith.constant dense<0.000000e+00> : vector<512x128xf32>
    %2 = tpu.matmul %0, %1, %cst {dimension_numbers = #tpu.dot_dimension_numbers<[1], [0], [0], [1], [0, 0, 1, 1], [], []>} : vector<512x16xbf16>, vector<16x128xbf16>, vector<512x128xf32> -> vector<512x128xf32>
    %cst_3 = arith.constant 0.000000e+00 : f32
    %3 = vector.broadcast %cst_3 : f32 to vector<512x128xf32>
    %4 = arith.cmpf ogt, %2, %3 : vector<512x128xf32>
    %cst_4 = arith.constant 2.000000e-01 : f32
    %5 = vector.broadcast %cst_4 : f32 to vector<512x128xf32>
    %6 = arith.mulf %5, %2 : vector<512x128xf32>
    %7 = arith.select %4, %2, %6 : vector<512x128xi1>, vector<512x128xf32>
    %8 = arith.truncf %7 : vector<512x128xf32> to vector<512x128xbf16>
    %c0_5 = arith.constant 0 : index
    %c0_6 = arith.constant 0 : index
    %9 = vector.load %arg3[%c0_5, %c0_6] : memref<512x128xbf16, #tpu.memory_space<vmem>>, vector<512x128xbf16>
    tpu.vector_store %arg3[%c0_5, %c0_6], %8 {strides = array<i32>} : memref<512x128xbf16, #tpu.memory_space<vmem>>, vector<512x128xbf16>,
    return
  }
  func.func @transform_0(%arg0: i32) -> (i32, i32) {
    %c0_i32 = arith.constant 0 : i32
    %c0_i32_0 = arith.constant 0 : i32
    return %arg0, %c0_i32 : i32, i32
  }
  func.func @transform_1(%arg0: i32) -> (i32, i32) {
    %c0_i32 = arith.constant 0 : i32
    %c0_i32_0 = arith.constant 0 : i32
    %c0_i32_1 = arith.constant 0 : i32
    return %c0_i32, %c0_i32_0 : i32, i32
  }
  func.func @transform_2(%arg0: i32) -> (i32, i32) {
    %c0_i32 = arith.constant 0 : i32
    %c0_i32_0 = arith.constant 0 : i32
    return %arg0, %c0_i32 : i32, i32
  }
}

module attributes {stable_mosaic.version = 11 : i64} {
  func.func @_conv_bn_act_kernel(%arg0: memref<128x128xbf16, #tpu.memory_space<vmem>>, %arg1: memref<128x128xbf16, #tpu.memory_space<vmem>>, %arg2: memref<1x128xf32, #tpu.memory_space<vmem>>, %arg3: memref<1x128xf32, #tpu.memory_space<vmem>>, %arg4: memref<128x128xbf16, #tpu.memory_space<vmem>>) attributes {dimension_semantics = [], scalar_prefetch = 0 : i64, scratch_operands = 0 : i64, tpu.core_type = #tpu.core_type<tc>} {
    %c0 = arith.constant 0 : index
    %c0_0 = arith.constant 0 : index
    %0 = vector.load %arg0[%c0, %c0_0] : memref<128x128xbf16, #tpu.memory_space<vmem>>, vector<128x128xbf16>
    %c0_1 = arith.constant 0 : index
    %c0_2 = arith.constant 0 : index
    %1 = vector.load %arg1[%c0_1, %c0_2] : memref<128x128xbf16, #tpu.memory_space<vmem>>, vector<128x128xbf16>
    %cst = arith.constant dense<0.000000e+00> : vector<128x128xf32>
    %2 = tpu.matmul %0, %1, %cst {dimension_numbers = #tpu.dot_dimension_numbers<[1], [0], [0], [1], [0, 0, 1, 1], [], []>} : vector<128x128xbf16>, vector<128x128xbf16>, vector<128x128xf32> -> vector<128x128xf32>
    %cst_3 = arith.constant dense<0.000000e+00> : vector<128xf32>
    %3 = vector.multi_reduction <add>, %2, %cst_3 [0] : vector<128x128xf32> to vector<128xf32>
    %4 = vector.shape_cast %3 : vector<128xf32> to vector<1x128xf32>
    %5 = arith.mulf %2, %2 : vector<128x128xf32>
    %cst_4 = arith.constant dense<0.000000e+00> : vector<128xf32>
    %6 = vector.multi_reduction <add>, %5, %cst_4 [0] : vector<128x128xf32> to vector<128xf32>
    %7 = vector.shape_cast %6 : vector<128xf32> to vector<1x128xf32>
    %cst_5 = arith.constant 7.812500e-03 : f32
    %8 = vector.broadcast %cst_5 : f32 to vector<1x128xf32>
    %9 = arith.mulf %4, %8 : vector<1x128xf32>
    %cst_6 = arith.constant 7.812500e-03 : f32
    %10 = vector.broadcast %cst_6 : f32 to vector<1x128xf32>
    %11 = arith.mulf %7, %10 : vector<1x128xf32>
    %12 = arith.mulf %9, %9 : vector<1x128xf32>
    %13 = arith.subf %11, %12 : vector<1x128xf32>
    %cst_7 = arith.constant 0.000000e+00 : f32
    %14 = vector.broadcast %cst_7 : f32 to vector<1x128xf32>
    %15 = arith.maximumf %13, %14 : vector<1x128xf32>
    %c0_8 = arith.constant 0 : index
    %c0_9 = arith.constant 0 : index
    %16 = vector.load %arg2[%c0_8, %c0_9] : memref<1x128xf32, #tpu.memory_space<vmem>>, vector<1x128xf32>
    %cst_10 = arith.constant 9.99999974E-6 : f32
    %17 = vector.broadcast %cst_10 : f32 to vector<1x128xf32>
    %18 = arith.addf %15, %17 : vector<1x128xf32>
    %19 = math.rsqrt %18 : vector<1x128xf32>
    %20 = arith.mulf %16, %19 : vector<1x128xf32>
    %c0_11 = arith.constant 0 : index
    %c0_12 = arith.constant 0 : index
    %21 = vector.load %arg3[%c0_11, %c0_12] : memref<1x128xf32, #tpu.memory_space<vmem>>, vector<1x128xf32>
    %22 = arith.mulf %9, %20 : vector<1x128xf32>
    %23 = arith.subf %21, %22 : vector<1x128xf32>
    %24 = vector.broadcast %20 : vector<1x128xf32> to vector<128x128xf32>
    %25 = arith.mulf %2, %24 : vector<128x128xf32>
    %26 = vector.broadcast %23 : vector<1x128xf32> to vector<128x128xf32>
    %27 = arith.addf %25, %26 : vector<128x128xf32>
    %cst_13 = arith.constant 0.000000e+00 : f32
    %28 = vector.broadcast %cst_13 : f32 to vector<128x128xf32>
    %29 = arith.cmpf ogt, %27, %28 : vector<128x128xf32>
    %cst_14 = arith.constant 2.000000e-01 : f32
    %30 = vector.broadcast %cst_14 : f32 to vector<128x128xf32>
    %31 = arith.mulf %30, %27 : vector<128x128xf32>
    %32 = arith.select %29, %27, %31 : vector<128x128xi1>, vector<128x128xf32>
    %33 = arith.truncf %32 : vector<128x128xf32> to vector<128x128xbf16>
    %c0_15 = arith.constant 0 : index
    %c0_16 = arith.constant 0 : index
    %34 = vector.load %arg4[%c0_15, %c0_16] : memref<128x128xbf16, #tpu.memory_space<vmem>>, vector<128x128xbf16>
    tpu.vector_store %arg4[%c0_15, %c0_16], %33 {strides = array<i32>} : memref<128x128xbf16, #tpu.memory_space<vmem>>, vector<128x128xbf16>,
    return
  }
}

module attributes {stable_mosaic.version = 11 : i64} {
  func.func @_conv_bn_act_kernel(%arg0: memref<32x256xbf16, #tpu.memory_space<vmem>>, %arg1: memref<256x128xbf16, #tpu.memory_space<vmem>>, %arg2: memref<1x128xf32, #tpu.memory_space<vmem>>, %arg3: memref<1x128xf32, #tpu.memory_space<vmem>>, %arg4: memref<32x128xbf16, #tpu.memory_space<vmem>>) attributes {dimension_semantics = [], scalar_prefetch = 0 : i64, scratch_operands = 0 : i64, tpu.core_type = #tpu.core_type<tc>} {
    %c0 = arith.constant 0 : index
    %c0_0 = arith.constant 0 : index
    %0 = vector.load %arg0[%c0, %c0_0] : memref<32x256xbf16, #tpu.memory_space<vmem>>, vector<32x256xbf16>
    %c0_1 = arith.constant 0 : index
    %c0_2 = arith.constant 0 : index
    %1 = vector.load %arg1[%c0_1, %c0_2] : memref<256x128xbf16, #tpu.memory_space<vmem>>, vector<256x128xbf16>
    %cst = arith.constant dense<0.000000e+00> : vector<32x128xf32>
    %2 = tpu.matmul %0, %1, %cst {dimension_numbers = #tpu.dot_dimension_numbers<[1], [0], [0], [1], [0, 0, 1, 1], [], []>} : vector<32x256xbf16>, vector<256x128xbf16>, vector<32x128xf32> -> vector<32x128xf32>
    %cst_3 = arith.constant dense<0.000000e+00> : vector<128xf32>
    %3 = vector.multi_reduction <add>, %2, %cst_3 [0] : vector<32x128xf32> to vector<128xf32>
    %4 = vector.shape_cast %3 : vector<128xf32> to vector<1x128xf32>
    %5 = arith.mulf %2, %2 : vector<32x128xf32>
    %cst_4 = arith.constant dense<0.000000e+00> : vector<128xf32>
    %6 = vector.multi_reduction <add>, %5, %cst_4 [0] : vector<32x128xf32> to vector<128xf32>
    %7 = vector.shape_cast %6 : vector<128xf32> to vector<1x128xf32>
    %cst_5 = arith.constant 3.125000e-02 : f32
    %8 = vector.broadcast %cst_5 : f32 to vector<1x128xf32>
    %9 = arith.mulf %4, %8 : vector<1x128xf32>
    %cst_6 = arith.constant 3.125000e-02 : f32
    %10 = vector.broadcast %cst_6 : f32 to vector<1x128xf32>
    %11 = arith.mulf %7, %10 : vector<1x128xf32>
    %12 = arith.mulf %9, %9 : vector<1x128xf32>
    %13 = arith.subf %11, %12 : vector<1x128xf32>
    %cst_7 = arith.constant 0.000000e+00 : f32
    %14 = vector.broadcast %cst_7 : f32 to vector<1x128xf32>
    %15 = arith.maximumf %13, %14 : vector<1x128xf32>
    %c0_8 = arith.constant 0 : index
    %c0_9 = arith.constant 0 : index
    %16 = vector.load %arg2[%c0_8, %c0_9] : memref<1x128xf32, #tpu.memory_space<vmem>>, vector<1x128xf32>
    %cst_10 = arith.constant 9.99999974E-6 : f32
    %17 = vector.broadcast %cst_10 : f32 to vector<1x128xf32>
    %18 = arith.addf %15, %17 : vector<1x128xf32>
    %19 = math.rsqrt %18 : vector<1x128xf32>
    %20 = arith.mulf %16, %19 : vector<1x128xf32>
    %c0_11 = arith.constant 0 : index
    %c0_12 = arith.constant 0 : index
    %21 = vector.load %arg3[%c0_11, %c0_12] : memref<1x128xf32, #tpu.memory_space<vmem>>, vector<1x128xf32>
    %22 = arith.mulf %9, %20 : vector<1x128xf32>
    %23 = arith.subf %21, %22 : vector<1x128xf32>
    %24 = vector.broadcast %20 : vector<1x128xf32> to vector<32x128xf32>
    %25 = arith.mulf %2, %24 : vector<32x128xf32>
    %26 = vector.broadcast %23 : vector<1x128xf32> to vector<32x128xf32>
    %27 = arith.addf %25, %26 : vector<32x128xf32>
    %cst_13 = arith.constant 0.000000e+00 : f32
    %28 = vector.broadcast %cst_13 : f32 to vector<32x128xf32>
    %29 = arith.cmpf ogt, %27, %28 : vector<32x128xf32>
    %cst_14 = arith.constant 2.000000e-01 : f32
    %30 = vector.broadcast %cst_14 : f32 to vector<32x128xf32>
    %31 = arith.mulf %30, %27 : vector<32x128xf32>
    %32 = arith.select %29, %27, %31 : vector<32x128xi1>, vector<32x128xf32>
    %33 = arith.truncf %32 : vector<32x128xf32> to vector<32x128xbf16>
    %c0_15 = arith.constant 0 : index
    %c0_16 = arith.constant 0 : index
    %34 = vector.load %arg4[%c0_15, %c0_16] : memref<32x128xbf16, #tpu.memory_space<vmem>>, vector<32x128xbf16>
    tpu.vector_store %arg4[%c0_15, %c0_16], %33 {strides = array<i32>} : memref<32x128xbf16, #tpu.memory_space<vmem>>, vector<32x128xbf16>,
    return
  }
}

module attributes {stable_mosaic.version = 11 : i64} {
  func.func @_conv_act_kernel(%arg0: i32, %arg1: memref<16x512xbf16, #tpu.memory_space<vmem>>, %arg2: memref<512x128xbf16, #tpu.memory_space<vmem>>, %arg3: memref<16x128xf32, #tpu.memory_space<vmem>>) attributes {dimension_semantics = [#tpu.dimension_semantics<parallel>], iteration_bounds = array<i64: 1>, scalar_prefetch = 0 : i64, scratch_operands = 0 : i64, tpu.core_type = #tpu.core_type<tc>, window_params = [{transform_indices = @transform_0, window_bounds = array<i64: 16, 512>}, {pipeline_mode = #tpu.pipeline_mode<synchronous>, transform_indices = @transform_1, window_bounds = array<i64: 512, 128>}, {transform_indices = @transform_2, window_bounds = array<i64: 16, 128>}]} {
    %c0 = arith.constant 0 : index
    %c0_0 = arith.constant 0 : index
    %0 = vector.load %arg1[%c0, %c0_0] : memref<16x512xbf16, #tpu.memory_space<vmem>>, vector<16x512xbf16>
    %c0_1 = arith.constant 0 : index
    %c0_2 = arith.constant 0 : index
    %1 = vector.load %arg2[%c0_1, %c0_2] : memref<512x128xbf16, #tpu.memory_space<vmem>>, vector<512x128xbf16>
    %cst = arith.constant dense<0.000000e+00> : vector<16x128xf32>
    %2 = tpu.matmul %0, %1, %cst {dimension_numbers = #tpu.dot_dimension_numbers<[1], [0], [0], [1], [0, 0, 1, 1], [], []>} : vector<16x512xbf16>, vector<512x128xbf16>, vector<16x128xf32> -> vector<16x128xf32>
    %3 = math.absf %2 : vector<16x128xf32>
    %cst_3 = arith.constant 0.000000e+00 : f32
    %4 = vector.broadcast %cst_3 : f32 to vector<16x128xf32>
    %5 = arith.subf %4, %3 : vector<16x128xf32>
    %6 = math.exp %5 : vector<16x128xf32>
    %cst_4 = arith.constant 0.000000e+00 : f32
    %7 = vector.broadcast %cst_4 : f32 to vector<16x128xf32>
    %8 = arith.cmpf oge, %2, %7 : vector<16x128xf32>
    %cst_5 = arith.constant 1.000000e+00 : f32
    %9 = vector.broadcast %cst_5 : f32 to vector<16x128xf32>
    %10 = arith.select %8, %9, %6 : vector<16x128xi1>, vector<16x128xf32>
    %cst_6 = arith.constant 1.000000e+00 : f32
    %11 = vector.broadcast %cst_6 : f32 to vector<16x128xf32>
    %12 = arith.addf %11, %6 : vector<16x128xf32>
    %13 = tpu.reciprocal %12 {approx = true} : vector<16x128xf32> -> vector<16x128xf32>
    %14 = arith.mulf %10, %13 : vector<16x128xf32>
    %cst_7 = arith.constant 1.000000e+00 : f32
    %15 = vector.broadcast %cst_7 : f32 to vector<16x128xf32>
    %16 = arith.minimumf %14, %15 : vector<16x128xf32>
    %c0_8 = arith.constant 0 : index
    %c0_9 = arith.constant 0 : index
    %17 = vector.load %arg3[%c0_8, %c0_9] : memref<16x128xf32, #tpu.memory_space<vmem>>, vector<16x128xf32>
    tpu.vector_store %arg3[%c0_8, %c0_9], %16 {strides = array<i32>} : memref<16x128xf32, #tpu.memory_space<vmem>>, vector<16x128xf32>,
    return
  }
  func.func @transform_0(%arg0: i32) -> (i32, i32) {
    %c0_i32 = arith.constant 0 : i32
    %c0_i32_0 = arith.constant 0 : i32
    return %arg0, %c0_i32 : i32, i32
  }
  func.func @transform_1(%arg0: i32) -> (i32, i32) {
    %c0_i32 = arith.constant 0 : i32
    %c0_i32_0 = arith.constant 0 : i32
    %c0_i32_1 = arith.constant 0 : i32
    return %c0_i32, %c0_i32_0 : i32, i32
  }
  func.func @transform_2(%arg0: i32) -> (i32, i32) {
    %c0_i32 = arith.constant 0 : i32
    %c0_i32_0 = arith.constant 0 : i32
    return %arg0, %c0_i32 : i32, i32
  }
}

</mosaic_0001>

<llo_original>
// kernel: discriminator_forward.4
$region0: #{discriminator_forward.4}
  #allocation0 [shape = 'u32[]', space=smem, size = 0x4, offset = 0x4, fixed_abs, tag = 'smem constant byte address 0x4 - core index']
  #allocation1 [shape = 'u32[144,128]{1,0:T(1,128)}', space=vmem, size = 0x12000, scoped, tag = 'internal scratch']
  %s0 = inlined_call_operand.vmem [shape: bf16[512,16], index: 0, kind: input, shape index: {}]
  %s1 = inlined_call_operand.vmem [shape: bf16[16,128], index: 1, kind: input, shape index: {}]
  %s2 = inlined_call_operand.vmem [shape: bf16[512,128], index: 2, kind: output, shape index: {}]
  %s3 = sld [smem:[#allocation0]]
  $region18: #{discriminator_forward.4} parent=0
    _
  %s5 = ssub.s32 1, %s3
  %s6 = scalar_select 0, %s5, %s3
  // Predicated region
  $region2: #{discriminator_forward.4} parent=0 // pred_check
    _
  $region3: #{discriminator_forward.4} parent=0 // pred_check_branch
    %8 = sbr.rel (0) target = $region5
  $region4: #{discriminator_forward.4} parent=0 // pred_region
    _
  $region5: #{discriminator_forward.4} parent=0 // pred_fallthru
    _
  // Predicated region
  $region6: #{discriminator_forward.4} parent=0 // pred_check
    _
  $region7: #{discriminator_forward.4} parent=0 // pred_check_branch
    %10 = sbr.rel (0) target = $region9
  $region8: #{discriminator_forward.4} parent=0 // pred_region
    _
  $region9: #{discriminator_forward.4} parent=0 // pred_fallthru
    _
  %v12 = vld [vmem:[%s0] sm:$0xf]
  %v13 = vld [vmem:[%s0 + $0x4] sm:$0xf]
  %v14 = vld [vmem:[%s0 + $0x8] sm:$0xf]
  %v15 = vld [vmem:[%s0 + $0xc] sm:$0xf]
  %v16 = vld [vmem:[%s0 + $0x10] sm:$0xf]
  %v17 = vld [vmem:[%s0 + $0x14] sm:$0xf]
  %v18 = vld [vmem:[%s0 + $0x18] sm:$0xf]
  %v19 = vld [vmem:[%s0 + $0x1c] sm:$0xf]
  %v20 = vld [vmem:[%s0 + $0x20] sm:$0xf]
  %v21 = vld [vmem:[%s0 + $0x24] sm:$0xf]
  %v22 = vld [vmem:[%s0 + $0x28] sm:$0xf]
  %v23 = vld [vmem:[%s0 + $0x2c] sm:$0xf]
  %v24 = vld [vmem:[%s0 + $0x30] sm:$0xf]
  %v25 = vld [vmem:[%s0 + $0x34] sm:$0xf]
  %v26 = vld [vmem:[%s0 + $0x38] sm:$0xf]
  %v27 = vld [vmem:[%s0 + $0x3c] sm:$0xf]
  %v28 = vld [vmem:[%s0 + $0x40] sm:$0xf]
  %v29 = vld [vmem:[%s0 + $0x44] sm:$0xf]
  %v30 = vld [vmem:[%s0 + $0x48] sm:$0xf]
  %v31 = vld [vmem:[%s0 + $0x4c] sm:$0xf]
  %v32 = vld [vmem:[%s0 + $0x50] sm:$0xf]
  %v33 = vld [vmem:[%s0 + $0x54] sm:$0xf]
  %v34 = vld [vmem:[%s0 + $0x58] sm:$0xf]
  %v35 = vld [vmem:[%s0 + $0x5c] sm:$0xf]
  %v36 = vld [vmem:[%s0 + $0x60] sm:$0xf]
  %v37 = vld [vmem:[%s0 + $0x64] sm:$0xf]
  %v38 = vld [vmem:[%s0 + $0x68] sm:$0xf]
  %v39 = vld [vmem:[%s0 + $0x6c] sm:$0xf]
  %v40 = vld [vmem:[%s0 + $0x70] sm:$0xf]
  %v41 = vld [vmem:[%s0 + $0x74] sm:$0xf]
  %v42 = vld [vmem:[%s0 + $0x78] sm:$0xf]
  %v43 = vld [vmem:[%s0 + $0x7c] sm:$0xf]
  %v44 = vld [vmem:[%s0 + $0x80] sm:$0xf]
  %v45 = vld [vmem:[%s0 + $0x84] sm:$0xf]
  %v46 = vld [vmem:[%s0 + $0x88] sm:$0xf]
  %v47 = vld [vmem:[%s0 + $0x8c] sm:$0xf]
  %v48 = vld [vmem:[%s0 + $0x90] sm:$0xf]
  %v49 = vld [vmem:[%s0 + $0x94] sm:$0xf]
  %v50 = vld [vmem:[%s0 + $0x98] sm:$0xf]
  %v51 = vld [vmem:[%s0 + $0x9c] sm:$0xf]
  %v52 = vld [vmem:[%s0 + $0xa0] sm:$0xf]
  %v53 = vld [vmem:[%s0 + $0xa4] sm:$0xf]
  %v54 = vld [vmem:[%s0 + $0xa8] sm:$0xf]
  %v55 = vld [vmem:[%s0 + $0xac] sm:$0xf]
  %v56 = vld [vmem:[%s0 + $0xb0] sm:$0xf]
  %v57 = vld [vmem:[%s0 + $0xb4] sm:$0xf]
  %v58 = vld [vmem:[%s0 + $0xb8] sm:$0xf]
  %v59 = vld [vmem:[%s0 + $0xbc] sm:$0xf]
  %v60 = vld [vmem:[%s0 + $0xc0] sm:$0xf]
  %v61 = vld [vmem:[%s0 + $0xc4] sm:$0xf]
  %v62 = vld [vmem:[%s0 + $0xc8] sm:$0xf]
  %v63 = vld [vmem:[%s0 + $0xcc] sm:$0xf]
  %v64 = vld [vmem:[%s0 + $0xd0] sm:$0xf]
  %v65 = vld [vmem:[%s0 + $0xd4] sm:$0xf]
  %v66 = vld [vmem:[%s0 + $0xd8] sm:$0xf]
  %v67 = vld [vmem:[%s0 + $0xdc] sm:$0xf]
  %v68 = vld [vmem:[%s0 + $0xe0] sm:$0xf]
  %v69 = vld [vmem:[%s0 + $0xe4] sm:$0xf]
  %v70 = vld [vmem:[%s0 + $0xe8] sm:$0xf]
  %v71 = vld [vmem:[%s0 + $0xec] sm:$0xf]
  %v72 = vld [vmem:[%s0 + $0xf0] sm:$0xf]
  %v73 = vld [vmem:[%s0 + $0xf4] sm:$0xf]
  %v74 = vld [vmem:[%s0 + $0xf8] sm:$0xf]
  %v75 = vld [vmem:[%s0 + $0xfc] sm:$0xf]
  %v76 = vld [vmem:[%s1] sm:$0xf]
  %v77 = vld [vmem:[%s1 + $0x4] sm:$0xf]
  %v142 = vunpack.c.l.b16 %v12
  %v143 = vunpack.c.l.b16 %v13
  %v144 = vunpack.c.l.b16 %v14
  %v145 = vunpack.c.l.b16 %v15
  %v146 = vunpack.c.l.b16 %v16
  %v147 = vunpack.c.l.b16 %v17
  %v148 = vunpack.c.l.b16 %v18
  %v149 = vunpack.c.l.b16 %v19
  %v150 = vunpack.c.l.b16 %v20
  %v151 = vunpack.c.l.b16 %v21
  %v152 = vunpack.c.l.b16 %v22
  %v153 = vunpack.c.l.b16 %v23
  %v154 = vunpack.c.l.b16 %v24
  %v155 = vunpack.c.l.b16 %v25
  %v156 = vunpack.c.l.b16 %v26
  %v157 = vunpack.c.l.b16 %v27
  %v158 = vunpack.c.l.b16 %v28
  %v159 = vunpack.c.l.b16 %v29
  %v160 = vunpack.c.l.b16 %v30
  %v161 = vunpack.c.l.b16 %v31
  %v162 = vunpack.c.l.b16 %v32
  %v163 = vunpack.c.l.b16 %v33
  %v164 = vunpack.c.l.b16 %v34
  %v165 = vunpack.c.l.b16 %v35
  %v166 = vunpack.c.l.b16 %v36
  %v167 = vunpack.c.l.b16 %v37
  %v168 = vunpack.c.l.b16 %v38
  %v169 = vunpack.c.l.b16 %v39
  %v170 = vunpack.c.l.b16 %v40
  %v171 = vunpack.c.l.b16 %v41
  %v172 = vunpack.c.l.b16 %v42
  %v173 = vunpack.c.l.b16 %v43
  %v174 = vunpack.c.l.b16 %v44
  %v175 = vunpack.c.l.b16 %v45
  %v176 = vunpack.c.l.b16 %v46
  %v177 = vunpack.c.l.b16 %v47
  %v178 = vunpack.c.l.b16 %v48
  %v179 = vunpack.c.l.b16 %v49
  %v180 = vunpack.c.l.b16 %v50
  %v181 = vunpack.c.l.b16 %v51
  %v182 = vunpack.c.l.b16 %v52
  %v183 = vunpack.c.l.b16 %v53
  %v184 = vunpack.c.l.b16 %v54
  %v185 = vunpack.c.l.b16 %v55
  %v186 = vunpack.c.l.b16 %v56
  %v187 = vunpack.c.l.b16 %v57
  %v188 = vunpack.c.l.b16 %v58
  %v189 = vunpack.c.l.b16 %v59
  %v190 = vunpack.c.l.b16 %v60
  %v191 = vunpack.c.l.b16 %v61
  %v192 = vunpack.c.l.b16 %v62
  %v193 = vunpack.c.l.b16 %v63
  %v194 = vunpack.c.l.b16 %v64
  %v195 = vunpack.c.l.b16 %v65
  %v196 = vunpack.c.l.b16 %v66
  %v197 = vunpack.c.l.b16 %v67
  %v198 = vunpack.c.l.b16 %v68
  %v199 = vunpack.c.l.b16 %v69
  %v200 = vunpack.c.l.b16 %v70
  %v201 = vunpack.c.l.b16 %v71
  %v202 = vunpack.c.l.b16 %v72
  %v203 = vunpack.c.l.b16 %v73
  %v204 = vunpack.c.l.b16 %v74
  %v205 = vunpack.c.l.b16 %v75
  %v206 = vpack.c.b16 %v143, %v142
  %v207 = vpack.c.b16 %v145, %v144
  %v208 = vpack.c.b16 %v147, %v146
  %v209 = vpack.c.b16 %v149, %v148
  %v210 = vpack.c.b16 %v151, %v150
  %v211 = vpack.c.b16 %v153, %v152
  %v212 = vpack.c.b16 %v155, %v154
  %v213 = vpack.c.b16 %v157, %v156
  %v214 = vpack.c.b16 %v159, %v158
  %v215 = vpack.c.b16 %v161, %v160
  %v216 = vpack.c.b16 %v163, %v162
  %v217 = vpack.c.b16 %v165, %v164
  %v218 = vpack.c.b16 %v167, %v166
  %v219 = vpack.c.b16 %v169, %v168
  %v220 = vpack.c.b16 %v171, %v170
  %v221 = vpack.c.b16 %v173, %v172
  %v222 = vpack.c.b16 %v175, %v174
  %v223 = vpack.c.b16 %v177, %v176
  %v224 = vpack.c.b16 %v179, %v178
  %v225 = vpack.c.b16 %v181, %v180
  %v226 = vpack.c.b16 %v183, %v182
  %v227 = vpack.c.b16 %v185, %v184
  %v228 = vpack.c.b16 %v187, %v186
  %v229 = vpack.c.b16 %v189, %v188
  %v230 = vpack.c.b16 %v191, %v190
  %v231 = vpack.c.b16 %v193, %v192
  %v232 = vpack.c.b16 %v195, %v194
  %v233 = vpack.c.b16 %v197, %v196
  %v234 = vpack.c.b16 %v199, %v198
  %v235 = vpack.c.b16 %v201, %v200
  %v236 = vpack.c.b16 %v203, %v202
  %v237 = vpack.c.b16 %v205, %v204
  %v240 = vunpack.c.l.b16 %v76
  %v241 = vunpack.c.l.b16 %v77
  %v242 = vpack.c.b16 %v241, %v240
  %vm244 = vcmask 130048
  %v246 = vsel %vm244, %v206, 0
  %v249 = vsel %vm244, %v207, 0
  %v252 = vsel %vm244, %v208, 0
  %v255 = vsel %vm244, %v209, 0
  %v258 = vsel %vm244, %v210, 0
  %v261 = vsel %vm244, %v211, 0
  %v264 = vsel %vm244, %v212, 0
  %v267 = vsel %vm244, %v213, 0
  %v270 = vsel %vm244, %v214, 0
  %v273 = vsel %vm244, %v215, 0
  %v276 = vsel %vm244, %v216, 0
  %v279 = vsel %vm244, %v217, 0
  %v282 = vsel %vm244, %v218, 0
  %v285 = vsel %vm244, %v219, 0
  %v288 = vsel %vm244, %v220, 0
  %v291 = vsel %vm244, %v221, 0
  %v294 = vsel %vm244, %v222, 0
  %v297 = vsel %vm244, %v223, 0
  %v300 = vsel %vm244, %v224, 0
  %v303 = vsel %vm244, %v225, 0
  %v306 = vsel %vm244, %v226, 0
  %v309 = vsel %vm244, %v227, 0
  %v312 = vsel %vm244, %v228, 0
  %v315 = vsel %vm244, %v229, 0
  %v318 = vsel %vm244, %v230, 0
  %v321 = vsel %vm244, %v231, 0
  %v324 = vsel %vm244, %v232, 0
  %v327 = vsel %vm244, %v233, 0
  %v330 = vsel %vm244, %v234, 0
  %v333 = vsel %vm244, %v235, 0
  %v336 = vsel %vm244, %v236, 0
  %v339 = vsel %vm244, %v237, 0
  %341 = vmatprep.subr.bf16.mxu0 0
  %342 = vmatpush1.bf16.msra.mxu0 %v242
  %343 = vmatprep.subr.bf16.mxu0 0
  %344 = vmatpush1.bf16.msra.mxu0 0
  %345 = vmatprep.subr.bf16.mxu0 0
  %346 = vmatpush1.bf16.msra.mxu0 0
  %347 = vmatprep.subr.bf16.mxu0 0
  %348 = vmatpush1.bf16.msra.mxu0 0
  %349 = vmatprep.subr.bf16.mxu0 0
  %350 = vmatpush1.bf16.msra.mxu0 0
  %351 = vmatprep.subr.bf16.mxu0 0
  %352 = vmatpush1.bf16.msra.mxu0 0
  %353 = vmatprep.subr.bf16.mxu0 0
  %354 = vmatpush1.bf16.msra.mxu0 0
  %355 = vmatprep.subr.bf16.mxu0 0
  %356 = vmatpush1.bf16.msra.mxu0 0
  %357 = vmatprep.subr.bf16.mxu0 0
  %358 = vmatpush1.bf16.msra.mxu0 0
  %359 = vmatprep.subr.bf16.mxu0 0
  %360 = vmatpush1.bf16.msra.mxu0 0
  %361 = vmatprep.subr.bf16.mxu0 0
  %362 = vmatpush1.bf16.msra.mxu0 0
  %363 = vmatprep.subr.bf16.mxu0 0
  %364 = vmatpush1.bf16.msra.mxu0 0
  %365 = vmatprep.subr.bf16.mxu0 0
  %366 = vmatpush1.bf16.msra.mxu0 0
  %367 = vmatprep.subr.bf16.mxu0 0
  %368 = vmatpush1.bf16.msra.mxu0 0
  %369 = vmatprep.subr.bf16.mxu0 0
  %370 = vmatpush1.bf16.msra.mxu0 0
  %371 = vmatprep.subr.bf16.mxu0 0
  %372 = vmatpush1.bf16.msra.mxu0 0
  %373 = vmatprep.mubr.bf16.mxu0 0
  %374 = vmatmul.mubr.bf16.gmra.mrb[0].mxu0 %v246
  %v375 = vpop.f32.mrb[0].mxu0
  %v376 = vadd.f32 0.0, %v375
  %v377 = vpop.f32.mrb[0].mxu0
  %v378 = vpop.f32.mrb[0].mxu0
  %v379 = vadd.f32 0.0, %v378
  %v380 = vpop.f32.mrb[0].mxu0
  %381 = vmatprep.mubr.bf16.mxu0 0
  %382 = vmatmul.mubr.bf16.gmra.mrb[0].mxu0 %v249
  %v383 = vpop.f32.mrb[0].mxu0
  %v384 = vadd.f32 0.0, %v383
  %v385 = vpop.f32.mrb[0].mxu0
  %v386 = vpop.f32.mrb[0].mxu0
  %v387 = vadd.f32 0.0, %v386
  %v388 = vpop.f32.mrb[0].mxu0
  %389 = vmatprep.mubr.bf16.mxu0 0
  %390 = vmatmul.mubr.bf16.gmra.mrb[0].mxu0 %v252
  %v391 = vpop.f32.mrb[0].mxu0
  %v392 = vadd.f32 0.0, %v391
  %v393 = vpop.f32.mrb[0].mxu0
  %v394 = vpop.f32.mrb[0].mxu0
  %v395 = vadd.f32 0.0, %v394
  %v396 = vpop.f32.mrb[0].mxu0
  %397 = vmatprep.mubr.bf16.mxu0 0
  %398 = vmatmul.mubr.bf16.gmra.mrb[0].mxu0 %v255
  %v399 = vpop.f32.mrb[0].mxu0
  %v400 = vadd.f32 0.0, %v399
  %v401 = vpop.f32.mrb[0].mxu0
  %v402 = vpop.f32.mrb[0].mxu0
  %v403 = vadd.f32 0.0, %v402
  %v404 = vpop.f32.mrb[0].mxu0
  %405 = vmatprep.mubr.bf16.mxu0 0
  %406 = vmatmul.mubr.bf16.gmra.mrb[0].mxu0 %v258
  %v407 = vpop.f32.mrb[0].mxu0
  %v408 = vadd.f32 0.0, %v407
  %v409 = vpop.f32.mrb[0].mxu0
  %v410 = vpop.f32.mrb[0].mxu0
  %v411 = vadd.f32 0.0, %v410
  %v412 = vpop.f32.mrb[0].mxu0
  %413 = vmatprep.mubr.bf16.mxu0 0
  %414 = vmatmul.mubr.bf16.gmra.mrb[0].mxu0 %v261
  %v415 = vpop.f32.mrb[0].mxu0
  %v416 = vadd.f32 0.0, %v415
  %v417 = vpop.f32.mrb[0].mxu0
  %v418 = vpop.f32.mrb[0].mxu0
  %v419 = vadd.f32 0.0, %v418
  %v420 = vpop.f32.mrb[0].mxu0
  %421 = vmatprep.mubr.bf16.mxu0 0
  %422 = vmatmul.mubr.bf16.gmra.mrb[0].mxu0 %v264
  %v423 = vpop.f32.mrb[0].mxu0
  %v424 = vadd.f32 0.0, %v423
  %v425 = vpop.f32.mrb[0].mxu0
  %v426 = vpop.f32.mrb[0].mxu0
  %v427 = vadd.f32 0.0, %v426
  %v428 = vpop.f32.mrb[0].mxu0
  %429 = vmatprep.mubr.bf16.mxu0 0
  %430 = vmatmul.mubr.bf16.gmra.mrb[0].mxu0 %v267
  %v431 = vpop.f32.mrb[0].mxu0
  %v432 = vadd.f32 0.0, %v431
  %v433 = vpop.f32.mrb[0].mxu0
  %v434 = vpop.f32.mrb[0].mxu0
  %v435 = vadd.f32 0.0, %v434
  %v436 = vpop.f32.mrb[0].mxu0
  %437 = vmatprep.mubr.bf16.mxu0 0
  %438 = vmatmul.mubr.bf16.gmra.mrb[0].mxu0 %v270
  %v439 = vpop.f32.mrb[0].mxu0
  %v440 = vadd.f32 0.0, %v439
  %v441 = vpop.f32.mrb[0].mxu0
  %v442 = vpop.f32.mrb[0].mxu0
  %v443 = vadd.f32 0.0, %v442
  %v444 = vpop.f32.mrb[0].mxu0
  %445 = vmatprep.mubr.bf16.mxu0 0
  %446 = vmatmul.mubr.bf16.gmra.mrb[0].mxu0 %v273
  %v447 = vpop.f32.mrb[0].mxu0
  %v448 = vadd.f32 0.0, %v447
  %v449 = vpop.f32.mrb[0].mxu0
  %v450 = vpop.f32.mrb[0].mxu0
  %v451 = vadd.f32 0.0, %v450
  %v452 = vpop.f32.mrb[0].mxu0
  %453 = vmatprep.mubr.bf16.mxu0 0
  %454 = vmatmul.mubr.bf16.gmra.mrb[0].mxu0 %v276
  %v455 = vpop.f32.mrb[0].mxu0
  %v456 = vadd.f32 0.0, %v455
  %v457 = vpop.f32.mrb[0].mxu0
  %v458 = vpop.f32.mrb[0].mxu0
  %v459 = vadd.f32 0.0, %v458
  %v460 = vpop.f32.mrb[0].mxu0
  %461 = vmatprep.mubr.bf16.mxu0 0
  %462 = vmatmul.mubr.bf16.gmra.mrb[0].mxu0 %v279
  %v463 = vpop.f32.mrb[0].mxu0
  %v464 = vadd.f32 0.0, %v463
  %v465 = vpop.f32.mrb[0].mxu0
  %v466 = vpop.f32.mrb[0].mxu0
  %v467 = vadd.f32 0.0, %v466
  %v468 = vpop.f32.mrb[0].mxu0
  %469 = vmatprep.mubr.bf16.mxu0 0
  %470 = vmatmul.mubr.bf16.gmra.mrb[0].mxu0 %v282
  %v471 = vpop.f32.mrb[0].mxu0
  %v472 = vadd.f32 0.0, %v471
  %v473 = vpop.f32.mrb[0].mxu0
  %v474 = vpop.f32.mrb[0].mxu0
  %v475 = vadd.f32 0.0, %v474
  %v476 = vpop.f32.mrb[0].mxu0
  %477 = vmatprep.mubr.bf16.mxu0 0
  %478 = vmatmul.mubr.bf16.gmra.mrb[0].mxu0 %v285
  %v479 = vpop.f32.mrb[0].mxu0
  %v480 = vadd.f32 0.0, %v479
  %v481 = vpop.f32.mrb[0].mxu0
  %v482 = vpop.f32.mrb[0].mxu0
  %v483 = vadd.f32 0.0, %v482
  %v484 = vpop.f32.mrb[0].mxu0
  %485 = vmatprep.mubr.bf16.mxu0 0
  %486 = vmatmul.mubr.bf16.gmra.mrb[0].mxu0 %v288
  %v487 = vpop.f32.mrb[0].mxu0
  %v488 = vadd.f32 0.0, %v487
  %v489 = vpop.f32.mrb[0].mxu0
  %v490 = vpop.f32.mrb[0].mxu0
  %v491 = vadd.f32 0.0, %v490
  %v492 = vpop.f32.mrb[0].mxu0
  %493 = vmatprep.mubr.bf16.mxu0 0
  %494 = vmatmul.mubr.bf16.gmra.mrb[0].mxu0 %v291
  %v495 = vpop.f32.mrb[0].mxu0
  %v496 = vadd.f32 0.0, %v495
  %v497 = vpop.f32.mrb[0].mxu0
  %v498 = vpop.f32.mrb[0].mxu0
  %v499 = vadd.f32 0.0, %v498
  %v500 = vpop.f32.mrb[0].mxu0
  %501 = vmatprep.mubr.bf16.mxu0 0
  %502 = vmatmul.mubr.bf16.gmra.mrb[0].mxu0 %v294
  %v503 = vpop.f32.mrb[0].mxu0
  %v504 = vadd.f32 0.0, %v503
  %v505 = vpop.f32.mrb[0].mxu0
  %v506 = vpop.f32.mrb[0].mxu0
  %v507 = vadd.f32 0.0, %v506
  %v508 = vpop.f32.mrb[0].mxu0
  %509 = vmatprep.mubr.bf16.mxu0 0
  %510 = vmatmul.mubr.bf16.gmra.mrb[0].mxu0 %v297
  %v511 = vpop.f32.mrb[0].mxu0
  %v512 = vadd.f32 0.0, %v511
  %v513 = vpop.f32.mrb[0].mxu0
  %v514 = vpop.f32.mrb[0].mxu0
  %v515 = vadd.f32 0.0, %v514
  %v516 = vpop.f32.mrb[0].mxu0
  %517 = vmatprep.mubr.bf16.mxu0 0
  %518 = vmatmul.mubr.bf16.gmra.mrb[0].mxu0 %v300
  %v519 = vpop.f32.mrb[0].mxu0
  %v520 = vadd.f32 0.0, %v519
  %v521 = vpop.f32.mrb[0].mxu0
  %v522 = vpop.f32.mrb[0].mxu0
  %v523 = vadd.f32 0.0, %v522
  %v524 = vpop.f32.mrb[0].mxu0
  %525 = vmatprep.mubr.bf16.mxu0 0
  %526 = vmatmul.mubr.bf16.gmra.mrb[0].mxu0 %v303
  %v527 = vpop.f32.mrb[0].mxu0
  %v528 = vadd.f32 0.0, %v527
  %v529 = vpop.f32.mrb[0].mxu0
  %v530 = vpop.f32.mrb[0].mxu0
  %v531 = vadd.f32 0.0, %v530
  %v532 = vpop.f32.mrb[0].mxu0
  %533 = vmatprep.mubr.bf16.mxu0 0
  %534 = vmatmul.mubr.bf16.gmra.mrb[0].mxu0 %v306
  %v535 = vpop.f32.mrb[0].mxu0
  %v536 = vadd.f32 0.0, %v535
  %v537 = vpop.f32.mrb[0].mxu0
  %v538 = vpop.f32.mrb[0].mxu0
  %v539 = vadd.f32 0.0, %v538
  %v540 = vpop.f32.mrb[0].mxu0
  %541 = vmatprep.mubr.bf16.mxu0 0
  %542 = vmatmul.mubr.bf16.gmra.mrb[0].mxu0 %v309
  %v543 = vpop.f32.mrb[0].mxu0
  %v544 = vadd.f32 0.0, %v543
  %v545 = vpop.f32.mrb[0].mxu0
  %v546 = vpop.f32.mrb[0].mxu0
  %v547 = vadd.f32 0.0, %v546
  %v548 = vpop.f32.mrb[0].mxu0
  %549 = vmatprep.mubr.bf16.mxu0 0
  %550 = vmatmul.mubr.bf16.gmra.mrb[0].mxu0 %v312
  %v551 = vpop.f32.mrb[0].mxu0
  %v552 = vadd.f32 0.0, %v551
  %v553 = vpop.f32.mrb[0].mxu0
  %v554 = vpop.f32.mrb[0].mxu0
  %v555 = vadd.f32 0.0, %v554
  %v556 = vpop.f32.mrb[0].mxu0
  %557 = vmatprep.mubr.bf16.mxu0 0
  %558 = vmatmul.mubr.bf16.gmra.mrb[0].mxu0 %v315
  %v559 = vpop.f32.mrb[0].mxu0
  %v560 = vadd.f32 0.0, %v559
  %v561 = vpop.f32.mrb[0].mxu0
  %v562 = vpop.f32.mrb[0].mxu0
  %v563 = vadd.f32 0.0, %v562
  %v564 = vpop.f32.mrb[0].mxu0
  %565 = vmatprep.mubr.bf16.mxu0 0
  %566 = vmatmul.mubr.bf16.gmra.mrb[0].mxu0 %v318
  %v567 = vpop.f32.mrb[0].mxu0
  %v568 = vadd.f32 0.0, %v567
  %v569 = vpop.f32.mrb[0].mxu0
  %v570 = vpop.f32.mrb[0].mxu0
  %v571 = vadd.f32 0.0, %v570
  %v572 = vpop.f32.mrb[0].mxu0
  %573 = vmatprep.mubr.bf16.mxu0 0
  %574 = vmatmul.mubr.bf16.gmra.mrb[0].mxu0 %v321
  %v575 = vpop.f32.mrb[0].mxu0
  %v576 = vadd.f32 0.0, %v575
  %v577 = vpop.f32.mrb[0].mxu0
  %v578 = vpop.f32.mrb[0].mxu0
  %v579 = vadd.f32 0.0, %v578
  %v580 = vpop.f32.mrb[0].mxu0
  %581 = vmatprep.mubr.bf16.mxu0 0
  %582 = vmatmul.mubr.bf16.gmra.mrb[0].mxu0 %v324
  %v583 = vpop.f32.mrb[0].mxu0
  %v584 = vadd.f32 0.0, %v583
  %v585 = vpop.f32.mrb[0].mxu0
  %v586 = vpop.f32.mrb[0].mxu0
  %v587 = vadd.f32 0.0, %v586
  %v588 = vpop.f32.mrb[0].mxu0
  %589 = vmatprep.mubr.bf16.mxu0 0
  %590 = vmatmul.mubr.bf16.gmra.mrb[0].mxu0 %v327
  %v591 = vpop.f32.mrb[0].mxu0
  %v592 = vadd.f32 0.0, %v591
  %v593 = vpop.f32.mrb[0].mxu0
  %v594 = vpop.f32.mrb[0].mxu0
  %v595 = vadd.f32 0.0, %v594
  %v596 = vpop.f32.mrb[0].mxu0
  %597 = vmatprep.mubr.bf16.mxu0 0
  %598 = vmatmul.mubr.bf16.gmra.mrb[0].mxu0 %v330
  %v599 = vpop.f32.mrb[0].mxu0
  %v600 = vadd.f32 0.0, %v599
  %v601 = vpop.f32.mrb[0].mxu0
  %v602 = vpop.f32.mrb[0].mxu0
  %v603 = vadd.f32 0.0, %v602
  %v604 = vpop.f32.mrb[0].mxu0
  %605 = vmatprep.mubr.bf16.mxu0 0
  %606 = vmatmul.mubr.bf16.gmra.mrb[0].mxu0 %v333
  %v607 = vpop.f32.mrb[0].mxu0
  %v608 = vadd.f32 0.0, %v607
  %v609 = vpop.f32.mrb[0].mxu0
  %v610 = vpop.f32.mrb[0].mxu0
  %v611 = vadd.f32 0.0, %v610
  %v612 = vpop.f32.mrb[0].mxu0
  %613 = vmatprep.mubr.bf16.mxu0 0
  %614 = vmatmul.mubr.bf16.gmra.mrb[0].mxu0 %v336
  %v615 = vpop.f32.mrb[0].mxu0
  %v616 = vadd.f32 0.0, %v615
  %v617 = vpop.f32.mrb[0].mxu0
  %v618 = vpop.f32.mrb[0].mxu0
  %v619 = vadd.f32 0.0, %v618
  %v620 = vpop.f32.mrb[0].mxu0
  %621 = vmatprep.mubr.bf16.mxu0 0
  %622 = vmatmul.mubr.bf16.gmra.mrb[0].mxu0 %v339
  %v623 = vpop.f32.mrb[0].mxu0
  %v624 = vadd.f32 0.0, %v623
  %v625 = vpop.f32.mrb[0].mxu0
  %v626 = vpop.f32.mrb[0].mxu0
  %v627 = vadd.f32 0.0, %v626
  %v628 = vpop.f32.mrb[0].mxu0
  %629 = vdwg.mxu0
  %vm630 = vcmp.gt.f32.partialorder %v376, 0.0
  %vm631 = vcmp.gt.f32.partialorder %v379, 0.0
  %vm632 = vcmp.gt.f32.partialorder %v384, 0.0
  %vm633 = vcmp.gt.f32.partialorder %v387, 0.0
  %vm634 = vcmp.gt.f32.partialorder %v392, 0.0
  %vm635 = vcmp.gt.f32.partialorder %v395, 0.0
  %vm636 = vcmp.gt.f32.partialorder %v400, 0.0
  %vm637 = vcmp.gt.f32.partialorder %v403, 0.0
  %vm638 = vcmp.gt.f32.partialorder %v408, 0.0
  %vm639 = vcmp.gt.f32.partialorder %v411, 0.0
  %vm640 = vcmp.gt.f32.partialorder %v416, 0.0
  %vm641 = vcmp.gt.f32.partialorder %v419, 0.0
  %vm642 = vcmp.gt.f32.partialorder %v424, 0.0
  %vm643 = vcmp.gt.f32.partialorder %v427, 0.0
  %vm644 = vcmp.gt.f32.partialorder %v432, 0.0
  %vm645 = vcmp.gt.f32.partialorder %v435, 0.0
  %vm646 = vcmp.gt.f32.partialorder %v440, 0.0
  %vm647 = vcmp.gt.f32.partialorder %v443, 0.0
  %vm648 = vcmp.gt.f32.partialorder %v448, 0.0
  %vm649 = vcmp.gt.f32.partialorder %v451, 0.0
  %vm650 = vcmp.gt.f32.partialorder %v456, 0.0
  %vm651 = vcmp.gt.f32.partialorder %v459, 0.0
  %vm652 = vcmp.gt.f32.partialorder %v464, 0.0
  %vm653 = vcmp.gt.f32.partialorder %v467, 0.0
  %vm654 = vcmp.gt.f32.partialorder %v472, 0.0
  %vm655 = vcmp.gt.f32.partialorder %v475, 0.0
  %vm656 = vcmp.gt.f32.partialorder %v480, 0.0
  %vm657 = vcmp.gt.f32.partialorder %v483, 0.0
  %vm658 = vcmp.gt.f32.partialorder %v488, 0.0
  %vm659 = vcmp.gt.f32.partialorder %v491, 0.0
  %vm660 = vcmp.gt.f32.partialorder %v496, 0.0
  %vm661 = vcmp.gt.f32.partialorder %v499, 0.0
  %vm662 = vcmp.gt.f32.partialorder %v504, 0.0
  %vm663 = vcmp.gt.f32.partialorder %v507, 0.0
  %vm664 = vcmp.gt.f32.partialorder %v512, 0.0
  %vm665 = vcmp.gt.f32.partialorder %v515, 0.0
  %vm666 = vcmp.gt.f32.partialorder %v520, 0.0
  %vm667 = vcmp.gt.f32.partialorder %v523, 0.0
  %vm668 = vcmp.gt.f32.partialorder %v528, 0.0
  %vm669 = vcmp.gt.f32.partialorder %v531, 0.0
  %vm670 = vcmp.gt.f32.partialorder %v536, 0.0
  %vm671 = vcmp.gt.f32.partialorder %v539, 0.0
  %vm672 = vcmp.gt.f32.partialorder %v544, 0.0
  %vm673 = vcmp.gt.f32.partialorder %v547, 0.0
  %vm674 = vcmp.gt.f32.partialorder %v552, 0.0
  %vm675 = vcmp.gt.f32.partialorder %v555, 0.0
  %vm676 = vcmp.gt.f32.partialorder %v560, 0.0
  %vm677 = vcmp.gt.f32.partialorder %v563, 0.0
  %vm678 = vcmp.gt.f32.partialorder %v568, 0.0
  %vm679 = vcmp.gt.f32.partialorder %v571, 0.0
  %vm680 = vcmp.gt.f32.partialorder %v576, 0.0
  %vm681 = vcmp.gt.f32.partialorder %v579, 0.0
  %vm682 = vcmp.gt.f32.partialorder %v584, 0.0
  %vm683 = vcmp.gt.f32.partialorder %v587, 0.0
  %vm684 = vcmp.gt.f32.partialorder %v592, 0.0
  %vm685 = vcmp.gt.f32.partialorder %v595, 0.0
  %vm686 = vcmp.gt.f32.partialorder %v600, 0.0
  %vm687 = vcmp.gt.f32.partialorder %v603, 0.0
  %vm688 = vcmp.gt.f32.partialorder %v608, 0.0
  %vm689 = vcmp.gt.f32.partialorder %v611, 0.0
  %vm690 = vcmp.gt.f32.partialorder %v616, 0.0
  %vm691 = vcmp.gt.f32.partialorder %v619, 0.0
  %vm692 = vcmp.gt.f32.partialorder %v624, 0.0
  %vm693 = vcmp.gt.f32.partialorder %v627, 0.0
  %v694 = vmul.f32 %v376, 0.2
  %v695 = vmul.f32 %v379, 0.2
  %v696 = vmul.f32 %v384, 0.2
  %v697 = vmul.f32 %v387, 0.2
  %v698 = vmul.f32 %v392, 0.2
  %v699 = vmul.f32 %v395, 0.2
  %v700 = vmul.f32 %v400, 0.2
  %v701 = vmul.f32 %v403, 0.2
  %v702 = vmul.f32 %v408, 0.2
  %v703 = vmul.f32 %v411, 0.2
  %v704 = vmul.f32 %v416, 0.2
  %v705 = vmul.f32 %v419, 0.2
  %v706 = vmul.f32 %v424, 0.2
  %v707 = vmul.f32 %v427, 0.2
  %v708 = vmul.f32 %v432, 0.2
  %v709 = vmul.f32 %v435, 0.2
  %v710 = vmul.f32 %v440, 0.2
  %v711 = vmul.f32 %v443, 0.2
  %v712 = vmul.f32 %v448, 0.2
  %v713 = vmul.f32 %v451, 0.2
  %v714 = vmul.f32 %v456, 0.2
  %v715 = vmul.f32 %v459, 0.2
  %v716 = vmul.f32 %v464, 0.2
  %v717 = vmul.f32 %v467, 0.2
  %v718 = vmul.f32 %v472, 0.2
  %v719 = vmul.f32 %v475, 0.2
  %v720 = vmul.f32 %v480, 0.2
  %v721 = vmul.f32 %v483, 0.2
  %v722 = vmul.f32 %v488, 0.2
  %v723 = vmul.f32 %v491, 0.2
  %v724 = vmul.f32 %v496, 0.2
  %v725 = vmul.f32 %v499, 0.2
  %v726 = vmul.f32 %v504, 0.2
  %v727 = vmul.f32 %v507, 0.2
  %v728 = vmul.f32 %v512, 0.2
  %v729 = vmul.f32 %v515, 0.2
  %v730 = vmul.f32 %v520, 0.2
  %v731 = vmul.f32 %v523, 0.2
  %v732 = vmul.f32 %v528, 0.2
  %v733 = vmul.f32 %v531, 0.2
  %v734 = vmul.f32 %v536, 0.2
  %v735 = vmul.f32 %v539, 0.2
  %v736 = vmul.f32 %v544, 0.2
  %v737 = vmul.f32 %v547, 0.2
  %v738 = vmul.f32 %v552, 0.2
  %v739 = vmul.f32 %v555, 0.2
  %v740 = vmul.f32 %v560, 0.2
  %v741 = vmul.f32 %v563, 0.2
  %v742 = vmul.f32 %v568, 0.2
  %v743 = vmul.f32 %v571, 0.2
  %v744 = vmul.f32 %v576, 0.2
  %v745 = vmul.f32 %v579, 0.2
  %v746 = vmul.f32 %v584, 0.2
  %v747 = vmul.f32 %v587, 0.2
  %v748 = vmul.f32 %v592, 0.2
  %v749 = vmul.f32 %v595, 0.2
  %v750 = vmul.f32 %v600, 0.2
  %v751 = vmul.f32 %v603, 0.2
  %v752 = vmul.f32 %v608, 0.2
  %v753 = vmul.f32 %v611, 0.2
  %v754 = vmul.f32 %v616, 0.2
  %v755 = vmul.f32 %v619, 0.2
  %v756 = vmul.f32 %v624, 0.2
  %v757 = vmul.f32 %v627, 0.2
  %v758 = vsel %vm630, %v376, %v694
  %v759 = vsel %vm631, %v379, %v695
  %v760 = vsel %vm632, %v384, %v696
  %v761 = vsel %vm633, %v387, %v697
  %v762 = vsel %vm634, %v392, %v698
  %v763 = vsel %vm635, %v395, %v699
  %v764 = vsel %vm636, %v400, %v700
  %v765 = vsel %vm637, %v403, %v701
  %v766 = vsel %vm638, %v408, %v702
  %v767 = vsel %vm639, %v411, %v703
  %v768 = vsel %vm640, %v416, %v704
  %v769 = vsel %vm641, %v419, %v705
  %v770 = vsel %vm642, %v424, %v706
  %v771 = vsel %vm643, %v427, %v707
  %v772 = vsel %vm644, %v432, %v708
  %v773 = vsel %vm645, %v435, %v709
  %v774 = vsel %vm646, %v440, %v710
  %v775 = vsel %vm647, %v443, %v711
  %v776 = vsel %vm648, %v448, %v712
  %v777 = vsel %vm649, %v451, %v713
  %v778 = vsel %vm650, %v456, %v714
  %v779 = vsel %vm651, %v459, %v715
  %v780 = vsel %vm652, %v464, %v716
  %v781 = vsel %vm653, %v467, %v717
  %v782 = vsel %vm654, %v472, %v718
  %v783 = vsel %vm655, %v475, %v719
  %v784 = vsel %vm656, %v480, %v720
  %v785 = vsel %vm657, %v483, %v721
  %v786 = vsel %vm658, %v488, %v722
  %v787 = vsel %vm659, %v491, %v723
  %v788 = vsel %vm660, %v496, %v724
  %v789 = vsel %vm661, %v499, %v725
  %v790 = vsel %vm662, %v504, %v726
  %v791 = vsel %vm663, %v507, %v727
  %v792 = vsel %vm664, %v512, %v728
  %v793 = vsel %vm665, %v515, %v729
  %v794 = vsel %vm666, %v520, %v730
  %v795 = vsel %vm667, %v523, %v731
  %v796 = vsel %vm668, %v528, %v732
  %v797 = vsel %vm669, %v531, %v733
  %v798 = vsel %vm670, %v536, %v734
  %v799 = vsel %vm671, %v539, %v735
  %v800 = vsel %vm672, %v544, %v736
  %v801 = vsel %vm673, %v547, %v737
  %v802 = vsel %vm674, %v552, %v738
  %v803 = vsel %vm675, %v555, %v739
  %v804 = vsel %vm676, %v560, %v740
  %v805 = vsel %vm677, %v563, %v741
  %v806 = vsel %vm678, %v568, %v742
  %v807 = vsel %vm679, %v571, %v743
  %v808 = vsel %vm680, %v576, %v744
  %v809 = vsel %vm681, %v579, %v745
  %v810 = vsel %vm682, %v584, %v746
  %v811 = vsel %vm683, %v587, %v747
  %v812 = vsel %vm684, %v592, %v748
  %v813 = vsel %vm685, %v595, %v749
  %v814 = vsel %vm686, %v600, %v750
  %v815 = vsel %vm687, %v603, %v751
  %v816 = vsel %vm688, %v608, %v752
  %v817 = vsel %vm689, %v611, %v753
  %v818 = vsel %vm690, %v616, %v754
  %v819 = vsel %vm691, %v619, %v755
  %v820 = vsel %vm692, %v624, %v756
  %v821 = vsel %vm693, %v627, %v757
  %v822 = vpack.c.bf16 %v759, %v758
  %v823 = vpack.c.bf16 %v761, %v760
  %v824 = vpack.c.bf16 %v763, %v762
  %v825 = vpack.c.bf16 %v765, %v764
  %v826 = vpack.c.bf16 %v767, %v766
  %v827 = vpack.c.bf16 %v769, %v768
  %v828 = vpack.c.bf16 %v771, %v770
  %v829 = vpack.c.bf16 %v773, %v772
  %v830 = vpack.c.bf16 %v775, %v774
  %v831 = vpack.c.bf16 %v777, %v776
  %v832 = vpack.c.bf16 %v779, %v778
  %v833 = vpack.c.bf16 %v781, %v780
  %v834 = vpack.c.bf16 %v783, %v782
  %v835 = vpack.c.bf16 %v785, %v784
  %v836 = vpack.c.bf16 %v787, %v786
  %v837 = vpack.c.bf16 %v789, %v788
  %v838 = vpack.c.bf16 %v791, %v790
  %v839 = vpack.c.bf16 %v793, %v792
  %v840 = vpack.c.bf16 %v795, %v794
  %v841 = vpack.c.bf16 %v797, %v796
  %v842 = vpack.c.bf16 %v799, %v798
  %v843 = vpack.c.bf16 %v801, %v800
  %v844 = vpack.c.bf16 %v803, %v802
  %v845 = vpack.c.bf16 %v805, %v804
  %v846 = vpack.c.bf16 %v807, %v806
  %v847 = vpack.c.bf16 %v809, %v808
  %v848 = vpack.c.bf16 %v811, %v810
  %v849 = vpack.c.bf16 %v813, %v812
  %v850 = vpack.c.bf16 %v815, %v814
  %v851 = vpack.c.bf16 %v817, %v816
  %v852 = vpack.c.bf16 %v819, %v818
  %v853 = vpack.c.bf16 %v821, %v820
  %v886 = vunpack.c.l.b16 %v822
  %v887 = vunpack.c.h.b16 %v822
  %v888 = vunpack.c.l.b16 %v823
  %v889 = vunpack.c.h.b16 %v823
  %v890 = vunpack.c.l.b16 %v824
  %v891 = vunpack.c.h.b16 %v824
  %v892 = vunpack.c.l.b16 %v825
  %v893 = vunpack.c.h.b16 %v825
  %v894 = vunpack.c.l.b16 %v826
  %v895 = vunpack.c.h.b16 %v826
  %v896 = vunpack.c.l.b16 %v827
  %v897 = vunpack.c.h.b16 %v827
  %v898 = vunpack.c.l.b16 %v828
  %v899 = vunpack.c.h.b16 %v828
  %v900 = vunpack.c.l.b16 %v829
  %v901 = vunpack.c.h.b16 %v829
  %v902 = vunpack.c.l.b16 %v830
  %v903 = vunpack.c.h.b16 %v830
  %v904 = vunpack.c.l.b16 %v831
  %v905 = vunpack.c.h.b16 %v831
  %v906 = vunpack.c.l.b16 %v832
  %v907 = vunpack.c.h.b16 %v832
  %v908 = vunpack.c.l.b16 %v833
  %v909 = vunpack.c.h.b16 %v833
  %v910 = vunpack.c.l.b16 %v834
  %v911 = vunpack.c.h.b16 %v834
  %v912 = vunpack.c.l.b16 %v835
  %v913 = vunpack.c.h.b16 %v835
  %v914 = vunpack.c.l.b16 %v836
  %v915 = vunpack.c.h.b16 %v836
  %v916 = vunpack.c.l.b16 %v837
  %v917 = vunpack.c.h.b16 %v837
  %v918 = vunpack.c.l.b16 %v838
  %v919 = vunpack.c.h.b16 %v838
  %v920 = vunpack.c.l.b16 %v839
  %v921 = vunpack.c.h.b16 %v839
  %v922 = vunpack.c.l.b16 %v840
  %v923 = vunpack.c.h.b16 %v840
  %v924 = vunpack.c.l.b16 %v841
  %v925 = vunpack.c.h.b16 %v841
  %v926 = vunpack.c.l.b16 %v842
  %v927 = vunpack.c.h.b16 %v842
  %v928 = vunpack.c.l.b16 %v843
  %v929 = vunpack.c.h.b16 %v843
  %v930 = vunpack.c.l.b16 %v844
  %v931 = vunpack.c.h.b16 %v844
  %v932 = vunpack.c.l.b16 %v845
  %v933 = vunpack.c.h.b16 %v845
  %v934 = vunpack.c.l.b16 %v846
  %v935 = vunpack.c.h.b16 %v846
  %v936 = vunpack.c.l.b16 %v847
  %v937 = vunpack.c.h.b16 %v847
  %v938 = vunpack.c.l.b16 %v848
  %v939 = vunpack.c.h.b16 %v848
  %v940 = vunpack.c.l.b16 %v849
  %v941 = vunpack.c.h.b16 %v849
  %v942 = vunpack.c.l.b16 %v850
  %v943 = vunpack.c.h.b16 %v850
  %v944 = vunpack.c.l.b16 %v851
  %v945 = vunpack.c.h.b16 %v851
  %v946 = vunpack.c.l.b16 %v852
  %v947 = vunpack.c.h.b16 %v852
  %v948 = vunpack.c.l.b16 %v853
  %v949 = vunpack.c.h.b16 %v853
  %v950 = vpack.c.b16 %v886, %v886
  %v951 = vpack.c.b16 %v887, %v887
  %v952 = vpack.c.b16 %v888, %v888
  %v953 = vpack.c.b16 %v889, %v889
  %v954 = vpack.c.b16 %v890, %v890
  %v955 = vpack.c.b16 %v891, %v891
  %v956 = vpack.c.b16 %v892, %v892
  %v957 = vpack.c.b16 %v893, %v893
  %v958 = vpack.c.b16 %v894, %v894
  %v959 = vpack.c.b16 %v895, %v895
  %v960 = vpack.c.b16 %v896, %v896
  %v961 = vpack.c.b16 %v897, %v897
  %v962 = vpack.c.b16 %v898, %v898
  %v963 = vpack.c.b16 %v899, %v899
  %v964 = vpack.c.b16 %v900, %v900
  %v965 = vpack.c.b16 %v901, %v901
  %v966 = vpack.c.b16 %v902, %v902
  %v967 = vpack.c.b16 %v903, %v903
  %v968 = vpack.c.b16 %v904, %v904
  %v969 = vpack.c.b16 %v905, %v905
  %v970 = vpack.c.b16 %v906, %v906
  %v971 = vpack.c.b16 %v907, %v907
  %v972 = vpack.c.b16 %v908, %v908
  %v973 = vpack.c.b16 %v909, %v909
  %v974 = vpack.c.b16 %v910, %v910
  %v975 = vpack.c.b16 %v911, %v911
  %v976 = vpack.c.b16 %v912, %v912
  %v977 = vpack.c.b16 %v913, %v913
  %v978 = vpack.c.b16 %v914, %v914
  %v979 = vpack.c.b16 %v915, %v915
  %v980 = vpack.c.b16 %v916, %v916
  %v981 = vpack.c.b16 %v917, %v917
  %v982 = vpack.c.b16 %v918, %v918
  %v983 = vpack.c.b16 %v919, %v919
  %v984 = vpack.c.b16 %v920, %v920
  %v985 = vpack.c.b16 %v921, %v921
  %v986 = vpack.c.b16 %v922, %v922
  %v987 = vpack.c.b16 %v923, %v923
  %v988 = vpack.c.b16 %v924, %v924
  %v989 = vpack.c.b16 %v925, %v925
  %v990 = vpack.c.b16 %v926, %v926
  %v991 = vpack.c.b16 %v927, %v927
  %v992 = vpack.c.b16 %v928, %v928
  %v993 = vpack.c.b16 %v929, %v929
  %v994 = vpack.c.b16 %v930, %v930
  %v995 = vpack.c.b16 %v931, %v931
  %v996 = vpack.c.b16 %v932, %v932
  %v997 = vpack.c.b16 %v933, %v933
  %v998 = vpack.c.b16 %v934, %v934
  %v999 = vpack.c.b16 %v935, %v935
  %v1000 = vpack.c.b16 %v936, %v936
  %v1001 = vpack.c.b16 %v937, %v937
  %v1002 = vpack.c.b16 %v938, %v938
  %v1003 = vpack.c.b16 %v939, %v939
  %v1004 = vpack.c.b16 %v940, %v940
  %v1005 = vpack.c.b16 %v941, %v941
  %v1006 = vpack.c.b16 %v942, %v942
  %v1007 = vpack.c.b16 %v943, %v943
  %v1008 = vpack.c.b16 %v944, %v944
  %v1009 = vpack.c.b16 %v945, %v945
  %v1010 = vpack.c.b16 %v946, %v946
  %v1011 = vpack.c.b16 %v947, %v947
  %v1012 = vpack.c.b16 %v948, %v948
  %v1013 = vpack.c.b16 %v949, %v949
  %1078 = vst [vmem:[%s2] sm:$0xf] %v950
  %1079 = vst [vmem:[%s2 + $0x4] sm:$0xf] %v951
  %1080 = vst [vmem:[%s2 + $0x8] sm:$0xf] %v952
  %1081 = vst [vmem:[%s2 + $0xc] sm:$0xf] %v953
  %1082 = vst [vmem:[%s2 + $0x10] sm:$0xf] %v954
  %1083 = vst [vmem:[%s2 + $0x14] sm:$0xf] %v955
  %1084 = vst [vmem:[%s2 + $0x18] sm:$0xf] %v956
  %1085 = vst [vmem:[%s2 + $0x1c] sm:$0xf] %v957
  %1086 = vst [vmem:[%s2 + $0x20] sm:$0xf] %v958
  %1087 = vst [vmem:[%s2 + $0x24] sm:$0xf] %v959
  %1088 = vst [vmem:[%s2 + $0x28] sm:$0xf] %v960
  %1089 = vst [vmem:[%s2 + $0x2c] sm:$0xf] %v961
  %1090 = vst [vmem:[%s2 + $0x30] sm:$0xf] %v962
  %1091 = vst [vmem:[%s2 + $0x34] sm:$0xf] %v963
  %1092 = vst [vmem:[%s2 + $0x38] sm:$0xf] %v964
  %1093 = vst [vmem:[%s2 + $0x3c] sm:$0xf] %v965
  %1094 = vst [vmem:[%s2 + $0x40] sm:$0xf] %v966
  %1095 = vst [vmem:[%s2 + $0x44] sm:$0xf] %v967
  %1096 = vst [vmem:[%s2 + $0x48] sm:$0xf] %v968
  %1097 = vst [vmem:[%s2 + $0x4c] sm:$0xf] %v969
  %1098 = vst [vmem:[%s2 + $0x50] sm:$0xf] %v970
  %1099 = vst [vmem:[%s2 + $0x54] sm:$0xf] %v971
  %1100 = vst [vmem:[%s2 + $0x58] sm:$0xf] %v972
  %1101 = vst [vmem:[%s2 + $0x5c] sm:$0xf] %v973
  %1102 = vst [vmem:[%s2 + $0x60] sm:$0xf] %v974
  %1103 = vst [vmem:[%s2 + $0x64] sm:$0xf] %v975
  %1104 = vst [vmem:[%s2 + $0x68] sm:$0xf] %v976
  %1105 = vst [vmem:[%s2 + $0x6c] sm:$0xf] %v977
  %1106 = vst [vmem:[%s2 + $0x70] sm:$0xf] %v978
  %1107 = vst [vmem:[%s2 + $0x74] sm:$0xf] %v979
  %1108 = vst [vmem:[%s2 + $0x78] sm:$0xf] %v980
  %1109 = vst [vmem:[%s2 + $0x7c] sm:$0xf] %v981
  %1110 = vst [vmem:[%s2 + $0x80] sm:$0xf] %v982
  %1111 = vst [vmem:[%s2 + $0x84] sm:$0xf] %v983
  %1112 = vst [vmem:[%s2 + $0x88] sm:$0xf] %v984
  %1113 = vst [vmem:[%s2 + $0x8c] sm:$0xf] %v985
  %1114 = vst [vmem:[%s2 + $0x90] sm:$0xf] %v986
  %1115 = vst [vmem:[%s2 + $0x94] sm:$0xf] %v987
  %1116 = vst [vmem:[%s2 + $0x98] sm:$0xf] %v988
  %1117 = vst [vmem:[%s2 + $0x9c] sm:$0xf] %v989
  %1118 = vst [vmem:[%s2 + $0xa0] sm:$0xf] %v990
  %1119 = vst [vmem:[%s2 + $0xa4] sm:$0xf] %v991
  %1120 = vst [vmem:[%s2 + $0xa8] sm:$0xf] %v992
  %1121 = vst [vmem:[%s2 + $0xac] sm:$0xf] %v993
  %1122 = vst [vmem:[%s2 + $0xb0] sm:$0xf] %v994
  %1123 = vst [vmem:[%s2 + $0xb4] sm:$0xf] %v995
  %1124 = vst [vmem:[%s2 + $0xb8] sm:$0xf] %v996
  %1125 = vst [vmem:[%s2 + $0xbc] sm:$0xf] %v997
  %1126 = vst [vmem:[%s2 + $0xc0] sm:$0xf] %v998
  %1127 = vst [vmem:[%s2 + $0xc4] sm:$0xf] %v999
  %1128 = vst [vmem:[%s2 + $0xc8] sm:$0xf] %v1000
  %1129 = vst [vmem:[%s2 + $0xcc] sm:$0xf] %v1001
  %1130 = vst [vmem:[%s2 + $0xd0] sm:$0xf] %v1002
  %1131 = vst [vmem:[%s2 + $0xd4] sm:$0xf] %v1003
  %1132 = vst [vmem:[%s2 + $0xd8] sm:$0xf] %v1004
  %1133 = vst [vmem:[%s2 + $0xdc] sm:$0xf] %v1005
  %1134 = vst [vmem:[%s2 + $0xe0] sm:$0xf] %v1006
  %1135 = vst [vmem:[%s2 + $0xe4] sm:$0xf] %v1007
  %1136 = vst [vmem:[%s2 + $0xe8] sm:$0xf] %v1008
  %1137 = vst [vmem:[%s2 + $0xec] sm:$0xf] %v1009
  %1138 = vst [vmem:[%s2 + $0xf0] sm:$0xf] %v1010
  %1139 = vst [vmem:[%s2 + $0xf4] sm:$0xf] %v1011
  %1140 = vst [vmem:[%s2 + $0xf8] sm:$0xf] %v1012
  %1141 = vst [vmem:[%s2 + $0xfc] sm:$0xf] %v1013
  // Predicated region
  $region10: #{discriminator_forward.4} parent=0 // pred_check
    _
  $region11: #{discriminator_forward.4} parent=0 // pred_check_branch
    %1143 = sbr.rel (0) target = $region13
  $region12: #{discriminator_forward.4} parent=0 // pred_region
    _
  $region13: #{discriminator_forward.4} parent=0 // pred_fallthru
    _
  // Predicated region
  $region14: #{discriminator_forward.4} parent=0 // pred_check
    _
  $region15: #{discriminator_forward.4} parent=0 // pred_check_branch
    %1145 = sbr.rel (0) target = $region17
  $region16: #{discriminator_forward.4} parent=0 // pred_region
    _
  $region17: #{discriminator_forward.4} parent=0 // pred_fallthru
    _

// kernel: discriminator_forward.5
$region0: #{discriminator_forward.5}
  #allocation0 [shape = 'u32[]', space=smem, size = 0x4, offset = 0x4, fixed_abs, tag = 'smem constant byte address 0x4 - core index']
  #allocation1 [shape = 'u32[144,128]{1,0:T(1,128)}', space=vmem, size = 0x12000, scoped, tag = 'internal scratch']
  %s0 = inlined_call_operand.vmem [shape: bf16[128,128], index: 0, kind: input, shape index: {}]
  %s1 = inlined_call_operand.vmem [shape: bf16[128,128], index: 1, kind: input, shape index: {}]
  %s2 = inlined_call_operand.vmem [shape: f32[1,128], index: 2, kind: input, shape index: {}]
  %s3 = inlined_call_operand.vmem [shape: f32[1,128], index: 3, kind: input, shape index: {}]
  %s4 = inlined_call_operand.vmem [shape: bf16[128,128], index: 4, kind: output, shape index: {}]
  %s5 = sld [smem:[#allocation0]]
  $region26: #{discriminator_forward.5} parent=0
    _
  %s7 = ssub.s32 1, %s5
  %s8 = scalar_select 0, %s7, %s5
  // Predicated region
  $region2: #{discriminator_forward.5} parent=0 // pred_check
    _
  $region3: #{discriminator_forward.5} parent=0 // pred_check_branch
    %10 = sbr.rel (0) target = $region5
  $region4: #{discriminator_forward.5} parent=0 // pred_region
    _
  $region5: #{discriminator_forward.5} parent=0 // pred_fallthru
    _
  // Predicated region
  $region6: #{discriminator_forward.5} parent=0 // pred_check
    _
  $region7: #{discriminator_forward.5} parent=0 // pred_check_branch
    %12 = sbr.rel (0) target = $region9
  $region8: #{discriminator_forward.5} parent=0 // pred_region
    _
  $region9: #{discriminator_forward.5} parent=0 // pred_fallthru
    _
  // Predicated region
  $region10: #{discriminator_forward.5} parent=0 // pred_check
    _
  $region11: #{discriminator_forward.5} parent=0 // pred_check_branch
    %14 = sbr.rel (0) target = $region13
  $region12: #{discriminator_forward.5} parent=0 // pred_region
    _
  $region13: #{discriminator_forward.5} parent=0 // pred_fallthru
    _
  // Predicated region
  $region14: #{discriminator_forward.5} parent=0 // pred_check
    _
  $region15: #{discriminator_forward.5} parent=0 // pred_check_branch
    %16 = sbr.rel (0) target = $region17
  $region16: #{discriminator_forward.5} parent=0 // pred_region
    _
  $region17: #{discriminator_forward.5} parent=0 // pred_fallthru
    _
  %v18 = vld [vmem:[%s0] sm:$0xf]
  %v19 = vld [vmem:[%s0 + $0x4] sm:$0xf]
  %v20 = vld [vmem:[%s0 + $0x8] sm:$0xf]
  %v21 = vld [vmem:[%s0 + $0xc] sm:$0xf]
  %v22 = vld [vmem:[%s0 + $0x10] sm:$0xf]
  %v23 = vld [vmem:[%s0 + $0x14] sm:$0xf]
  %v24 = vld [vmem:[%s0 + $0x18] sm:$0xf]
  %v25 = vld [vmem:[%s0 + $0x1c] sm:$0xf]
  %v26 = vld [vmem:[%s0 + $0x20] sm:$0xf]
  %v27 = vld [vmem:[%s0 + $0x24] sm:$0xf]
  %v28 = vld [vmem:[%s0 + $0x28] sm:$0xf]
  %v29 = vld [vmem:[%s0 + $0x2c] sm:$0xf]
  %v30 = vld [vmem:[%s0 + $0x30] sm:$0xf]
  %v31 = vld [vmem:[%s0 + $0x34] sm:$0xf]
  %v32 = vld [vmem:[%s0 + $0x38] sm:$0xf]
  %v33 = vld [vmem:[%s0 + $0x3c] sm:$0xf]
  %v34 = vld [vmem:[%s1] sm:$0xf]
  %v35 = vld [vmem:[%s1 + $0x4] sm:$0xf]
  %v36 = vld [vmem:[%s1 + $0x8] sm:$0xf]
  %v37 = vld [vmem:[%s1 + $0xc] sm:$0xf]
  %v38 = vld [vmem:[%s1 + $0x10] sm:$0xf]
  %v39 = vld [vmem:[%s1 + $0x14] sm:$0xf]
  %v40 = vld [vmem:[%s1 + $0x18] sm:$0xf]
  %v41 = vld [vmem:[%s1 + $0x1c] sm:$0xf]
  %v42 = vld [vmem:[%s1 + $0x20] sm:$0xf]
  %v43 = vld [vmem:[%s1 + $0x24] sm:$0xf]
  %v44 = vld [vmem:[%s1 + $0x28] sm:$0xf]
  %v45 = vld [vmem:[%s1 + $0x2c] sm:$0xf]
  %v46 = vld [vmem:[%s1 + $0x30] sm:$0xf]
  %v47 = vld [vmem:[%s1 + $0x34] sm:$0xf]
  %v48 = vld [vmem:[%s1 + $0x38] sm:$0xf]
  %v49 = vld [vmem:[%s1 + $0x3c] sm:$0xf]
  %v66 = vunpack.c.l.b16 %v18
  %v67 = vunpack.c.l.b16 %v19
  %v68 = vunpack.c.l.b16 %v20
  %v69 = vunpack.c.l.b16 %v21
  %v70 = vunpack.c.l.b16 %v22
  %v71 = vunpack.c.l.b16 %v23
  %v72 = vunpack.c.l.b16 %v24
  %v73 = vunpack.c.l.b16 %v25
  %v74 = vunpack.c.l.b16 %v26
  %v75 = vunpack.c.l.b16 %v27
  %v76 = vunpack.c.l.b16 %v28
  %v77 = vunpack.c.l.b16 %v29
  %v78 = vunpack.c.l.b16 %v30
  %v79 = vunpack.c.l.b16 %v31
  %v80 = vunpack.c.l.b16 %v32
  %v81 = vunpack.c.l.b16 %v33
  %v82 = vpack.c.b16 %v67, %v66
  %v83 = vpack.c.b16 %v69, %v68
  %v84 = vpack.c.b16 %v71, %v70
  %v85 = vpack.c.b16 %v73, %v72
  %v86 = vpack.c.b16 %v75, %v74
  %v87 = vpack.c.b16 %v77, %v76
  %v88 = vpack.c.b16 %v79, %v78
  %v89 = vpack.c.b16 %v81, %v80
  %v114 = vunpack.c.l.b16 %v34
  %v115 = vunpack.c.l.b16 %v35
  %v116 = vunpack.c.l.b16 %v36
  %v117 = vunpack.c.l.b16 %v37
  %v118 = vunpack.c.l.b16 %v38
  %v119 = vunpack.c.l.b16 %v39
  %v120 = vunpack.c.l.b16 %v40
  %v121 = vunpack.c.l.b16 %v41
  %v122 = vunpack.c.l.b16 %v42
  %v123 = vunpack.c.l.b16 %v43
  %v124 = vunpack.c.l.b16 %v44
  %v125 = vunpack.c.l.b16 %v45
  %v126 = vunpack.c.l.b16 %v46
  %v127 = vunpack.c.l.b16 %v47
  %v128 = vunpack.c.l.b16 %v48
  %v129 = vunpack.c.l.b16 %v49
  %v130 = vpack.c.b16 %v115, %v114
  %v131 = vpack.c.b16 %v117, %v116
  %v132 = vpack.c.b16 %v119, %v118
  %v133 = vpack.c.b16 %v121, %v120
  %v134 = vpack.c.b16 %v123, %v122
  %v135 = vpack.c.b16 %v125, %v124
  %v136 = vpack.c.b16 %v127, %v126
  %v137 = vpack.c.b16 %v129, %v128
  %146 = vmatprep.subr.bf16.mxu0 0
  %147 = vmatpush1.bf16.msra.mxu0 %v130
  %148 = vmatprep.subr.bf16.mxu0 0
  %149 = vmatpush1.bf16.msra.mxu0 %v131
  %150 = vmatprep.subr.bf16.mxu0 0
  %151 = vmatpush1.bf16.msra.mxu0 %v132
  %152 = vmatprep.subr.bf16.mxu0 0
  %153 = vmatpush1.bf16.msra.mxu0 %v133
  %154 = vmatprep.subr.bf16.mxu0 0
  %155 = vmatpush1.bf16.msra.mxu0 %v134
  %156 = vmatprep.subr.bf16.mxu0 0
  %157 = vmatpush1.bf16.msra.mxu0 %v135
  %158 = vmatprep.subr.bf16.mxu0 0
  %159 = vmatpush1.bf16.msra.mxu0 %v136
  %160 = vmatprep.subr.bf16.mxu0 0
  %161 = vmatpush1.bf16.msra.mxu0 %v137
  %162 = vmatprep.subr.bf16.mxu0 0
  %163 = vmatpush1.bf16.msra.mxu0 0
  %164 = vmatprep.subr.bf16.mxu0 0
  %165 = vmatpush1.bf16.msra.mxu0 0
  %166 = vmatprep.subr.bf16.mxu0 0
  %167 = vmatpush1.bf16.msra.mxu0 0
  %168 = vmatprep.subr.bf16.mxu0 0
  %169 = vmatpush1.bf16.msra.mxu0 0
  %170 = vmatprep.subr.bf16.mxu0 0
  %171 = vmatpush1.bf16.msra.mxu0 0
  %172 = vmatprep.subr.bf16.mxu0 0
  %173 = vmatpush1.bf16.msra.mxu0 0
  %174 = vmatprep.subr.bf16.mxu0 0
  %175 = vmatpush1.bf16.msra.mxu0 0
  %176 = vmatprep.subr.bf16.mxu0 0
  %177 = vmatpush1.bf16.msra.mxu0 0
  %178 = vmatprep.mubr.bf16.mxu0 0
  %179 = vmatmul.mubr.bf16.gmra.mrb[0].mxu0 %v82
  %v180 = vpop.f32.mrb[0].mxu0
  %v181 = vadd.f32 0.0, %v180
  %v182 = vpop.f32.mrb[0].mxu0
  %v183 = vpop.f32.mrb[0].mxu0
  %v184 = vadd.f32 0.0, %v183
  %v185 = vpop.f32.mrb[0].mxu0
  %186 = vmatprep.mubr.bf16.mxu0 0
  %187 = vmatmul.mubr.bf16.gmra.mrb[0].mxu0 %v83
  %v188 = vpop.f32.mrb[0].mxu0
  %v189 = vadd.f32 0.0, %v188
  %v190 = vpop.f32.mrb[0].mxu0
  %v191 = vpop.f32.mrb[0].mxu0
  %v192 = vadd.f32 0.0, %v191
  %v193 = vpop.f32.mrb[0].mxu0
  %194 = vmatprep.mubr.bf16.mxu0 0
  %195 = vmatmul.mubr.bf16.gmra.mrb[0].mxu0 %v84
  %v196 = vpop.f32.mrb[0].mxu0
  %v197 = vadd.f32 0.0, %v196
  %v198 = vpop.f32.mrb[0].mxu0
  %v199 = vpop.f32.mrb[0].mxu0
  %v200 = vadd.f32 0.0, %v199
  %v201 = vpop.f32.mrb[0].mxu0
  %202 = vmatprep.mubr.bf16.mxu0 0
  %203 = vmatmul.mubr.bf16.gmra.mrb[0].mxu0 %v85
  %v204 = vpop.f32.mrb[0].mxu0
  %v205 = vadd.f32 0.0, %v204
  %v206 = vpop.f32.mrb[0].mxu0
  %v207 = vpop.f32.mrb[0].mxu0
  %v208 = vadd.f32 0.0, %v207
  %v209 = vpop.f32.mrb[0].mxu0
  %210 = vmatprep.mubr.bf16.mxu0 0
  %211 = vmatmul.mubr.bf16.gmra.mrb[0].mxu0 %v86
  %v212 = vpop.f32.mrb[0].mxu0
  %v213 = vadd.f32 0.0, %v212
  %v214 = vpop.f32.mrb[0].mxu0
  %v215 = vpop.f32.mrb[0].mxu0
  %v216 = vadd.f32 0.0, %v215
  %v217 = vpop.f32.mrb[0].mxu0
  %218 = vmatprep.mubr.bf16.mxu0 0
  %219 = vmatmul.mubr.bf16.gmra.mrb[0].mxu0 %v87
  %v220 = vpop.f32.mrb[0].mxu0
  %v221 = vadd.f32 0.0, %v220
  %v222 = vpop.f32.mrb[0].mxu0
  %v223 = vpop.f32.mrb[0].mxu0
  %v224 = vadd.f32 0.0, %v223
  %v225 = vpop.f32.mrb[0].mxu0
  %226 = vmatprep.mubr.bf16.mxu0 0
  %227 = vmatmul.mubr.bf16.gmra.mrb[0].mxu0 %v88
  %v228 = vpop.f32.mrb[0].mxu0
  %v229 = vadd.f32 0.0, %v228
  %v230 = vpop.f32.mrb[0].mxu0
  %v231 = vpop.f32.mrb[0].mxu0
  %v232 = vadd.f32 0.0, %v231
  %v233 = vpop.f32.mrb[0].mxu0
  %234 = vmatprep.mubr.bf16.mxu0 0
  %235 = vmatmul.mubr.bf16.gmra.mrb[0].mxu0 %v89
  %v236 = vpop.f32.mrb[0].mxu0
  %v237 = vadd.f32 0.0, %v236
  %v238 = vpop.f32.mrb[0].mxu0
  %v239 = vpop.f32.mrb[0].mxu0
  %v240 = vadd.f32 0.0, %v239
  %v241 = vpop.f32.mrb[0].mxu0
  %242 = vdwg.mxu0
  %v243 = vadd.f32 %v181, %v184
  %v244 = vadd.f32 %v243, %v189
  %v245 = vadd.f32 %v244, %v192
  %v246 = vadd.f32 %v245, %v197
  %v247 = vadd.f32 %v246, %v200
  %v248 = vadd.f32 %v247, %v205
  %v249 = vadd.f32 %v248, %v208
  %v250 = vadd.f32 %v249, %v213
  %v251 = vadd.f32 %v250, %v216
  %v252 = vadd.f32 %v251, %v221
  %v253 = vadd.f32 %v252, %v224
  %v254 = vadd.f32 %v253, %v229
  %v255 = vadd.f32 %v254, %v232
  %v256 = vadd.f32 %v255, %v237
  %v257 = vadd.f32 %v256, %v240
  %v258 = vrot.slane %v257, 4
  %v259 = vadd.f32 %v257, %v258
  %v260 = vrot.slane %v259, 2
  %v261 = vadd.f32 %v259, %v260
  %v262 = vrot.slane %v261, 1
  %v263 = vadd.f32 %v261, %v262
  %v264 = vmul.f32 %v181, %v181
  %v265 = vmul.f32 %v184, %v184
  %v266 = vmul.f32 %v189, %v189
  %v267 = vmul.f32 %v192, %v192
  %v268 = vmul.f32 %v197, %v197
  %v269 = vmul.f32 %v200, %v200
  %v270 = vmul.f32 %v205, %v205
  %v271 = vmul.f32 %v208, %v208
  %v272 = vmul.f32 %v213, %v213
  %v273 = vmul.f32 %v216, %v216
  %v274 = vmul.f32 %v221, %v221
  %v275 = vmul.f32 %v224, %v224
  %v276 = vmul.f32 %v229, %v229
  %v277 = vmul.f32 %v232, %v232
  %v278 = vmul.f32 %v237, %v237
  %v279 = vmul.f32 %v240, %v240
  %v280 = vadd.f32 %v264, %v265
  %v281 = vadd.f32 %v280, %v266
  %v282 = vadd.f32 %v281, %v267
  %v283 = vadd.f32 %v282, %v268
  %v284 = vadd.f32 %v283, %v269
  %v285 = vadd.f32 %v284, %v270
  %v286 = vadd.f32 %v285, %v271
  %v287 = vadd.f32 %v286, %v272
  %v288 = vadd.f32 %v287, %v273
  %v289 = vadd.f32 %v288, %v274
  %v290 = vadd.f32 %v289, %v275
  %v291 = vadd.f32 %v290, %v276
  %v292 = vadd.f32 %v291, %v277
  %v293 = vadd.f32 %v292, %v278
  %v294 = vadd.f32 %v293, %v279
  %v295 = vrot.slane %v294, 4
  %v296 = vadd.f32 %v294, %v295
  %v297 = vrot.slane %v296, 2
  %v298 = vadd.f32 %v296, %v297
  %v299 = vrot.slane %v298, 1
  %v300 = vadd.f32 %v298, %v299
  %v301 = vmul.f32 %v263, 0.0078125
  %v302 = vmul.f32 %v300, 0.0078125
  %v303 = vmul.f32 %v301, %v301
  %v304 = vsub.f32 %v302, %v303
  %v305 = vmax.f32 %v304, 0.0
  %v306 = vld [vmem:[%s2] sm:$0x1]
  %v307 = vadd.f32 %v305, 1e-05
  %v308 = vrsqrt.pop %v307
  %v309 = vmul.f32 %v306, %v308
  %v310 = vld [vmem:[%s3] sm:$0x1]
  %v311 = vmul.f32 %v301, %v309
  %v312 = vsub.f32 %v310, %v311
  %v314 = vlaneseq
  %v315 = vshrl.u32 %v314, 7
  %v316 = vsub.s32 0, %v315
  %v317 = vrot.slane %v309, %v316
  %v319 = vmul.f32 %v181, %v317
  %v320 = vmul.f32 %v184, %v317
  %v321 = vmul.f32 %v189, %v317
  %v322 = vmul.f32 %v192, %v317
  %v323 = vmul.f32 %v197, %v317
  %v324 = vmul.f32 %v200, %v317
  %v325 = vmul.f32 %v205, %v317
  %v326 = vmul.f32 %v208, %v317
  %v327 = vmul.f32 %v213, %v317
  %v328 = vmul.f32 %v216, %v317
  %v329 = vmul.f32 %v221, %v317
  %v330 = vmul.f32 %v224, %v317
  %v331 = vmul.f32 %v229, %v317
  %v332 = vmul.f32 %v232, %v317
  %v333 = vmul.f32 %v237, %v317
  %v334 = vmul.f32 %v240, %v317
  %v336 = vlaneseq
  %v337 = vshrl.u32 %v336, 7
  %v338 = vsub.s32 0, %v337
  %v339 = vrot.slane %v312, %v338
  %v341 = vadd.f32 %v319, %v339
  %v342 = vadd.f32 %v320, %v339
  %v343 = vadd.f32 %v321, %v339
  %v344 = vadd.f32 %v322, %v339
  %v345 = vadd.f32 %v323, %v339
  %v346 = vadd.f32 %v324, %v339
  %v347 = vadd.f32 %v325, %v339
  %v348 = vadd.f32 %v326, %v339
  %v349 = vadd.f32 %v327, %v339
  %v350 = vadd.f32 %v328, %v339
  %v351 = vadd.f32 %v329, %v339
  %v352 = vadd.f32 %v330, %v339
  %v353 = vadd.f32 %v331, %v339
  %v354 = vadd.f32 %v332, %v339
  %v355 = vadd.f32 %v333, %v339
  %v356 = vadd.f32 %v334, %v339
  %vm357 = vcmp.gt.f32.partialorder %v341, 0.0
  %vm358 = vcmp.gt.f32.partialorder %v342, 0.0
  %vm359 = vcmp.gt.f32.partialorder %v343, 0.0
  %vm360 = vcmp.gt.f32.partialorder %v344, 0.0
  %vm361 = vcmp.gt.f32.partialorder %v345, 0.0
  %vm362 = vcmp.gt.f32.partialorder %v346, 0.0
  %vm363 = vcmp.gt.f32.partialorder %v347, 0.0
  %vm364 = vcmp.gt.f32.partialorder %v348, 0.0
  %vm365 = vcmp.gt.f32.partialorder %v349, 0.0
  %vm366 = vcmp.gt.f32.partialorder %v350, 0.0
  %vm367 = vcmp.gt.f32.partialorder %v351, 0.0
  %vm368 = vcmp.gt.f32.partialorder %v352, 0.0
  %vm369 = vcmp.gt.f32.partialorder %v353, 0.0
  %vm370 = vcmp.gt.f32.partialorder %v354, 0.0
  %vm371 = vcmp.gt.f32.partialorder %v355, 0.0
  %vm372 = vcmp.gt.f32.partialorder %v356, 0.0
  %v373 = vmul.f32 %v341, 0.2
  %v374 = vmul.f32 %v342, 0.2
  %v375 = vmul.f32 %v343, 0.2
  %v376 = vmul.f32 %v344, 0.2
  %v377 = vmul.f32 %v345, 0.2
  %v378 = vmul.f32 %v346, 0.2
  %v379 = vmul.f32 %v347, 0.2
  %v380 = vmul.f32 %v348, 0.2
  %v381 = vmul.f32 %v349, 0.2
  %v382 = vmul.f32 %v350, 0.2
  %v383 = vmul.f32 %v351, 0.2
  %v384 = vmul.f32 %v352, 0.2
  %v385 = vmul.f32 %v353, 0.2
  %v386 = vmul.f32 %v354, 0.2
  %v387 = vmul.f32 %v355, 0.2
  %v388 = vmul.f32 %v356, 0.2
  %v389 = vsel %vm357, %v341, %v373
  %v390 = vsel %vm358, %v342, %v374
  %v391 = vsel %vm359, %v343, %v375
  %v392 = vsel %vm360, %v344, %v376
  %v393 = vsel %vm361, %v345, %v377
  %v394 = vsel %vm362, %v346, %v378
  %v395 = vsel %vm363, %v347, %v379
  %v396 = vsel %vm364, %v348, %v380
  %v397 = vsel %vm365, %v349, %v381
  %v398 = vsel %vm366, %v350, %v382
  %v399 = vsel %vm367, %v351, %v383
  %v400 = vsel %vm368, %v352, %v384
  %v401 = vsel %vm369, %v353, %v385
  %v402 = vsel %vm370, %v354, %v386
  %v403 = vsel %vm371, %v355, %v387
  %v404 = vsel %vm372, %v356, %v388
  %v405 = vpack.c.bf16 %v390, %v389
  %v406 = vpack.c.bf16 %v392, %v391
  %v407 = vpack.c.bf16 %v394, %v393
  %v408 = vpack.c.bf16 %v396, %v395
  %v409 = vpack.c.bf16 %v398, %v397
  %v410 = vpack.c.bf16 %v400, %v399
  %v411 = vpack.c.bf16 %v402, %v401
  %v412 = vpack.c.bf16 %v404, %v403
  %v421 = vunpack.c.l.b16 %v405
  %v422 = vunpack.c.h.b16 %v405
  %v423 = vunpack.c.l.b16 %v406
  %v424 = vunpack.c.h.b16 %v406
  %v425 = vunpack.c.l.b16 %v407
  %v426 = vunpack.c.h.b16 %v407
  %v427 = vunpack.c.l.b16 %v408
  %v428 = vunpack.c.h.b16 %v408
  %v429 = vunpack.c.l.b16 %v409
  %v430 = vunpack.c.h.b16 %v409
  %v431 = vunpack.c.l.b16 %v410
  %v432 = vunpack.c.h.b16 %v410
  %v433 = vunpack.c.l.b16 %v411
  %v434 = vunpack.c.h.b16 %v411
  %v435 = vunpack.c.l.b16 %v412
  %v436 = vunpack.c.h.b16 %v412
  %v437 = vpack.c.b16 %v421, %v421
  %v438 = vpack.c.b16 %v422, %v422
  %v439 = vpack.c.b16 %v423, %v423
  %v440 = vpack.c.b16 %v424, %v424
  %v441 = vpack.c.b16 %v425, %v425
  %v442 = vpack.c.b16 %v426, %v426
  %v443 = vpack.c.b16 %v427, %v427
  %v444 = vpack.c.b16 %v428, %v428
  %v445 = vpack.c.b16 %v429, %v429
  %v446 = vpack.c.b16 %v430, %v430
  %v447 = vpack.c.b16 %v431, %v431
  %v448 = vpack.c.b16 %v432, %v432
  %v449 = vpack.c.b16 %v433, %v433
  %v450 = vpack.c.b16 %v434, %v434
  %v451 = vpack.c.b16 %v435, %v435
  %v452 = vpack.c.b16 %v436, %v436
  %469 = vst [vmem:[%s4] sm:$0xf] %v437
  %470 = vst [vmem:[%s4 + $0x4] sm:$0xf] %v438
  %471 = vst [vmem:[%s4 + $0x8] sm:$0xf] %v439
  %472 = vst [vmem:[%s4 + $0xc] sm:$0xf] %v440
  %473 = vst [vmem:[%s4 + $0x10] sm:$0xf] %v441
  %474 = vst [vmem:[%s4 + $0x14] sm:$0xf] %v442
  %475 = vst [vmem:[%s4 + $0x18] sm:$0xf] %v443
  %476 = vst [vmem:[%s4 + $0x1c] sm:$0xf] %v444
  %477 = vst [vmem:[%s4 + $0x20] sm:$0xf] %v445
  %478 = vst [vmem:[%s4 + $0x24] sm:$0xf] %v446
  %479 = vst [vmem:[%s4 + $0x28] sm:$0xf] %v447
  %480 = vst [vmem:[%s4 + $0x2c] sm:$0xf] %v448
  %481 = vst [vmem:[%s4 + $0x30] sm:$0xf] %v449
  %482 = vst [vmem:[%s4 + $0x34] sm:$0xf] %v450
  %483 = vst [vmem:[%s4 + $0x38] sm:$0xf] %v451
  %484 = vst [vmem:[%s4 + $0x3c] sm:$0xf] %v452
  // Predicated region
  $region18: #{discriminator_forward.5} parent=0 // pred_check
    _
  $region19: #{discriminator_forward.5} parent=0 // pred_check_branch
    %486 = sbr.rel (0) target = $region21
  $region20: #{discriminator_forward.5} parent=0 // pred_region
    _
  $region21: #{discriminator_forward.5} parent=0 // pred_fallthru
    _
  // Predicated region
  $region22: #{discriminator_forward.5} parent=0 // pred_check
    _
  $region23: #{discriminator_forward.5} parent=0 // pred_check_branch
    %488 = sbr.rel (0) target = $region25
  $region24: #{discriminator_forward.5} parent=0 // pred_region
    _
  $region25: #{discriminator_forward.5} parent=0 // pred_fallthru
    _

// kernel: discriminator_forward.6
$region0: #{discriminator_forward.6}
  #allocation0 [shape = 'u32[]', space=smem, size = 0x4, offset = 0x4, fixed_abs, tag = 'smem constant byte address 0x4 - core index']
  #allocation1 [shape = 'u32[144,128]{1,0:T(1,128)}', space=vmem, size = 0x12000, scoped, tag = 'internal scratch']
  %s0 = inlined_call_operand.vmem [shape: bf16[32,256], index: 0, kind: input, shape index: {}]
  %s1 = inlined_call_operand.vmem [shape: bf16[256,128], index: 1, kind: input, shape index: {}]
  %s2 = inlined_call_operand.vmem [shape: f32[1,128], index: 2, kind: input, shape index: {}]
  %s3 = inlined_call_operand.vmem [shape: f32[1,128], index: 3, kind: input, shape index: {}]
  %s4 = inlined_call_operand.vmem [shape: bf16[32,128], index: 4, kind: output, shape index: {}]
  %s5 = sld [smem:[#allocation0]]
  $region26: #{discriminator_forward.6} parent=0
    _
  %s7 = ssub.s32 1, %s5
  %s8 = scalar_select 0, %s7, %s5
  // Predicated region
  $region2: #{discriminator_forward.6} parent=0 // pred_check
    _
  $region3: #{discriminator_forward.6} parent=0 // pred_check_branch
    %10 = sbr.rel (0) target = $region5
  $region4: #{discriminator_forward.6} parent=0 // pred_region
    _
  $region5: #{discriminator_forward.6} parent=0 // pred_fallthru
    _
  // Predicated region
  $region6: #{discriminator_forward.6} parent=0 // pred_check
    _
  $region7: #{discriminator_forward.6} parent=0 // pred_check_branch
    %12 = sbr.rel (0) target = $region9
  $region8: #{discriminator_forward.6} parent=0 // pred_region
    _
  $region9: #{discriminator_forward.6} parent=0 // pred_fallthru
    _
  // Predicated region
  $region10: #{discriminator_forward.6} parent=0 // pred_check
    _
  $region11: #{discriminator_forward.6} parent=0 // pred_check_branch
    %14 = sbr.rel (0) target = $region13
  $region12: #{discriminator_forward.6} parent=0 // pred_region
    _
  $region13: #{discriminator_forward.6} parent=0 // pred_fallthru
    _
  // Predicated region
  $region14: #{discriminator_forward.6} parent=0 // pred_check
    _
  $region15: #{discriminator_forward.6} parent=0 // pred_check_branch
    %16 = sbr.rel (0) target = $region17
  $region16: #{discriminator_forward.6} parent=0 // pred_region
    _
  $region17: #{discriminator_forward.6} parent=0 // pred_fallthru
    _
  %v18 = vld [vmem:[%s0] sm:$0xff]
  %v19 = vld [vmem:[%s0 + $0x8] sm:$0xff]
  %v20 = vld [vmem:[%s0 + $0x10] sm:$0xff]
  %v21 = vld [vmem:[%s0 + $0x18] sm:$0xff]
  %v22 = vld [vmem:[%s1] sm:$0xf]
  %v23 = vld [vmem:[%s1 + $0x4] sm:$0xf]
  %v24 = vld [vmem:[%s1 + $0x8] sm:$0xf]
  %v25 = vld [vmem:[%s1 + $0xc] sm:$0xf]
  %v26 = vld [vmem:[%s1 + $0x10] sm:$0xf]
  %v27 = vld [vmem:[%s1 + $0x14] sm:$0xf]
  %v28 = vld [vmem:[%s1 + $0x18] sm:$0xf]
  %v29 = vld [vmem:[%s1 + $0x1c] sm:$0xf]
  %v30 = vld [vmem:[%s1 + $0x20] sm:$0xf]
  %v31 = vld [vmem:[%s1 + $0x24] sm:$0xf]
  %v32 = vld [vmem:[%s1 + $0x28] sm:$0xf]
  %v33 = vld [vmem:[%s1 + $0x2c] sm:$0xf]
  %v34 = vld [vmem:[%s1 + $0x30] sm:$0xf]
  %v35 = vld [vmem:[%s1 + $0x34] sm:$0xf]
  %v36 = vld [vmem:[%s1 + $0x38] sm:$0xf]
  %v37 = vld [vmem:[%s1 + $0x3c] sm:$0xf]
  %v38 = vld [vmem:[%s1 + $0x40] sm:$0xf]
  %v39 = vld [vmem:[%s1 + $0x44] sm:$0xf]
  %v40 = vld [vmem:[%s1 + $0x48] sm:$0xf]
  %v41 = vld [vmem:[%s1 + $0x4c] sm:$0xf]
  %v42 = vld [vmem:[%s1 + $0x50] sm:$0xf]
  %v43 = vld [vmem:[%s1 + $0x54] sm:$0xf]
  %v44 = vld [vmem:[%s1 + $0x58] sm:$0xf]
  %v45 = vld [vmem:[%s1 + $0x5c] sm:$0xf]
  %v46 = vld [vmem:[%s1 + $0x60] sm:$0xf]
  %v47 = vld [vmem:[%s1 + $0x64] sm:$0xf]
  %v48 = vld [vmem:[%s1 + $0x68] sm:$0xf]
  %v49 = vld [vmem:[%s1 + $0x6c] sm:$0xf]
  %v50 = vld [vmem:[%s1 + $0x70] sm:$0xf]
  %v51 = vld [vmem:[%s1 + $0x74] sm:$0xf]
  %v52 = vld [vmem:[%s1 + $0x78] sm:$0xf]
  %v53 = vld [vmem:[%s1 + $0x7c] sm:$0xf]
  %v58 = vunpack.c.l.b16 %v18
  %v59 = vunpack.c.h.b16 %v18
  %v60 = vunpack.c.l.b16 %v19
  %v61 = vunpack.c.h.b16 %v19
  %v62 = vunpack.c.l.b16 %v20
  %v63 = vunpack.c.h.b16 %v20
  %v64 = vunpack.c.l.b16 %v21
  %v65 = vunpack.c.h.b16 %v21
  %v66 = vpack.c.b16 %v60, %v58
  %v67 = vpack.c.b16 %v61, %v59
  %v68 = vpack.c.b16 %v64, %v62
  %v69 = vpack.c.b16 %v65, %v63
  %v106 = vunpack.c.l.b16 %v22
  %v107 = vunpack.c.l.b16 %v23
  %v108 = vunpack.c.l.b16 %v24
  %v109 = vunpack.c.l.b16 %v25
  %v110 = vunpack.c.l.b16 %v26
  %v111 = vunpack.c.l.b16 %v27
  %v112 = vunpack.c.l.b16 %v28
  %v113 = vunpack.c.l.b16 %v29
  %v114 = vunpack.c.l.b16 %v30
  %v115 = vunpack.c.l.b16 %v31
  %v116 = vunpack.c.l.b16 %v32
  %v117 = vunpack.c.l.b16 %v33
  %v118 = vunpack.c.l.b16 %v34
  %v119 = vunpack.c.l.b16 %v35
  %v120 = vunpack.c.l.b16 %v36
  %v121 = vunpack.c.l.b16 %v37
  %v122 = vunpack.c.l.b16 %v38
  %v123 = vunpack.c.l.b16 %v39
  %v124 = vunpack.c.l.b16 %v40
  %v125 = vunpack.c.l.b16 %v41
  %v126 = vunpack.c.l.b16 %v42
  %v127 = vunpack.c.l.b16 %v43
  %v128 = vunpack.c.l.b16 %v44
  %v129 = vunpack.c.l.b16 %v45
  %v130 = vunpack.c.l.b16 %v46
  %v131 = vunpack.c.l.b16 %v47
  %v132 = vunpack.c.l.b16 %v48
  %v133 = vunpack.c.l.b16 %v49
  %v134 = vunpack.c.l.b16 %v50
  %v135 = vunpack.c.l.b16 %v51
  %v136 = vunpack.c.l.b16 %v52
  %v137 = vunpack.c.l.b16 %v53
  %v138 = vpack.c.b16 %v107, %v106
  %v139 = vpack.c.b16 %v109, %v108
  %v140 = vpack.c.b16 %v111, %v110
  %v141 = vpack.c.b16 %v113, %v112
  %v142 = vpack.c.b16 %v115, %v114
  %v143 = vpack.c.b16 %v117, %v116
  %v144 = vpack.c.b16 %v119, %v118
  %v145 = vpack.c.b16 %v121, %v120
  %v146 = vpack.c.b16 %v123, %v122
  %v147 = vpack.c.b16 %v125, %v124
  %v148 = vpack.c.b16 %v127, %v126
  %v149 = vpack.c.b16 %v129, %v128
  %v150 = vpack.c.b16 %v131, %v130
  %v151 = vpack.c.b16 %v133, %v132
  %v152 = vpack.c.b16 %v135, %v134
  %v153 = vpack.c.b16 %v137, %v136
  %170 = vmatprep.subr.bf16.mxu0 0
  %171 = vmatpush1.bf16.msra.mxu0 %v138
  %172 = vmatprep.subr.bf16.mxu0 0
  %173 = vmatpush1.bf16.msra.mxu0 %v139
  %174 = vmatprep.subr.bf16.mxu0 0
  %175 = vmatpush1.bf16.msra.mxu0 %v140
  %176 = vmatprep.subr.bf16.mxu0 0
  %177 = vmatpush1.bf16.msra.mxu0 %v141
  %178 = vmatprep.subr.bf16.mxu0 0
  %179 = vmatpush1.bf16.msra.mxu0 %v142
  %180 = vmatprep.subr.bf16.mxu0 0
  %181 = vmatpush1.bf16.msra.mxu0 %v143
  %182 = vmatprep.subr.bf16.mxu0 0
  %183 = vmatpush1.bf16.msra.mxu0 %v144
  %184 = vmatprep.subr.bf16.mxu0 0
  %185 = vmatpush1.bf16.msra.mxu0 %v145
  %186 = vmatprep.subr.bf16.mxu0 0
  %187 = vmatpush1.bf16.msra.mxu0 %v146
  %188 = vmatprep.subr.bf16.mxu0 0
  %189 = vmatpush1.bf16.msra.mxu0 %v147
  %190 = vmatprep.subr.bf16.mxu0 0
  %191 = vmatpush1.bf16.msra.mxu0 %v148
  %192 = vmatprep.subr.bf16.mxu0 0
  %193 = vmatpush1.bf16.msra.mxu0 %v149
  %194 = vmatprep.subr.bf16.mxu0 0
  %195 = vmatpush1.bf16.msra.mxu0 %v150
  %196 = vmatprep.subr.bf16.mxu0 0
  %197 = vmatpush1.bf16.msra.mxu0 %v151
  %198 = vmatprep.subr.bf16.mxu0 0
  %199 = vmatpush1.bf16.msra.mxu0 %v152
  %200 = vmatprep.subr.bf16.mxu0 0
  %201 = vmatpush1.bf16.msra.mxu0 %v153
  %202 = vmatprep.mubr.bf16.mxu0 %v67
  %203 = vmatmul.mubr.bf16.gmra.mrb[0].mxu0 %v66
  %v204 = vpop.f32.mrb[0].mxu0
  %v205 = vadd.f32 0.0, %v204
  %v206 = vpop.f32.mrb[0].mxu0
  %v207 = vpop.f32.mrb[0].mxu0
  %v208 = vadd.f32 0.0, %v207
  %v209 = vpop.f32.mrb[0].mxu0
  %210 = vmatprep.mubr.bf16.mxu0 %v69
  %211 = vmatmul.mubr.bf16.gmra.mrb[0].mxu0 %v68
  %v212 = vpop.f32.mrb[0].mxu0
  %v213 = vadd.f32 0.0, %v212
  %v214 = vpop.f32.mrb[0].mxu0
  %v215 = vpop.f32.mrb[0].mxu0
  %v216 = vadd.f32 0.0, %v215
  %v217 = vpop.f32.mrb[0].mxu0
  %218 = vdwg.mxu0
  %v219 = vadd.f32 %v205, %v208
  %v220 = vadd.f32 %v219, %v213
  %v221 = vadd.f32 %v220, %v216
  %v222 = vrot.slane %v221, 4
  %v223 = vadd.f32 %v221, %v222
  %v224 = vrot.slane %v223, 2
  %v225 = vadd.f32 %v223, %v224
  %v226 = vrot.slane %v225, 1
  %v227 = vadd.f32 %v225, %v226
  %v228 = vmul.f32 %v205, %v205
  %v229 = vmul.f32 %v208, %v208
  %v230 = vmul.f32 %v213, %v213
  %v231 = vmul.f32 %v216, %v216
  %v232 = vadd.f32 %v228, %v229
  %v233 = vadd.f32 %v232, %v230
  %v234 = vadd.f32 %v233, %v231
  %v235 = vrot.slane %v234, 4
  %v236 = vadd.f32 %v234, %v235
  %v237 = vrot.slane %v236, 2
  %v238 = vadd.f32 %v236, %v237
  %v239 = vrot.slane %v238, 1
  %v240 = vadd.f32 %v238, %v239
  %v241 = vmul.f32 %v227, 0.03125
  %v242 = vmul.f32 %v240, 0.03125
  %v243 = vmul.f32 %v241, %v241
  %v244 = vsub.f32 %v242, %v243
  %v245 = vmax.f32 %v244, 0.0
  %v246 = vld [vmem:[%s2] sm:$0x1]
  %v247 = vadd.f32 %v245, 1e-05
  %v248 = vrsqrt.pop %v247
  %v249 = vmul.f32 %v246, %v248
  %v250 = vld [vmem:[%s3] sm:$0x1]
  %v251 = vmul.f32 %v241, %v249
  %v252 = vsub.f32 %v250, %v251
  %v254 = vlaneseq
  %v255 = vshrl.u32 %v254, 7
  %v256 = vsub.s32 0, %v255
  %v257 = vrot.slane %v249, %v256
  %v259 = vmul.f32 %v205, %v257
  %v260 = vmul.f32 %v208, %v257
  %v261 = vmul.f32 %v213, %v257
  %v262 = vmul.f32 %v216, %v257
  %v264 = vlaneseq
  %v265 = vshrl.u32 %v264, 7
  %v266 = vsub.s32 0, %v265
  %v267 = vrot.slane %v252, %v266
  %v269 = vadd.f32 %v259, %v267
  %v270 = vadd.f32 %v260, %v267
  %v271 = vadd.f32 %v261, %v267
  %v272 = vadd.f32 %v262, %v267
  %vm273 = vcmp.gt.f32.partialorder %v269, 0.0
  %vm274 = vcmp.gt.f32.partialorder %v270, 0.0
  %vm275 = vcmp.gt.f32.partialorder %v271, 0.0
  %vm276 = vcmp.gt.f32.partialorder %v272, 0.0
  %v277 = vmul.f32 %v269, 0.2
  %v278 = vmul.f32 %v270, 0.2
  %v279 = vmul.f32 %v271, 0.2
  %v280 = vmul.f32 %v272, 0.2
  %v281 = vsel %vm273, %v269, %v277
  %v282 = vsel %vm274, %v270, %v278
  %v283 = vsel %vm275, %v271, %v279
  %v284 = vsel %vm276, %v272, %v280
  %v285 = vpack.c.bf16 %v282, %v281
  %v286 = vpack.c.bf16 %v284, %v283
  %v289 = vunpack.c.l.b16 %v285
  %v290 = vunpack.c.h.b16 %v285
  %v291 = vunpack.c.l.b16 %v286
  %v292 = vunpack.c.h.b16 %v286
  %v293 = vpack.c.b16 %v289, %v289
  %v294 = vpack.c.b16 %v290, %v290
  %v295 = vpack.c.b16 %v291, %v291
  %v296 = vpack.c.b16 %v292, %v292
  %301 = vst [vmem:[%s4] sm:$0xf] %v293
  %302 = vst [vmem:[%s4 + $0x4] sm:$0xf] %v294
  %303 = vst [vmem:[%s4 + $0x8] sm:$0xf] %v295
  %304 = vst [vmem:[%s4 + $0xc] sm:$0xf] %v296
  // Predicated region
  $region18: #{discriminator_forward.6} parent=0 // pred_check
    _
  $region19: #{discriminator_forward.6} parent=0 // pred_check_branch
    %306 = sbr.rel (0) target = $region21
  $region20: #{discriminator_forward.6} parent=0 // pred_region
    _
  $region21: #{discriminator_forward.6} parent=0 // pred_fallthru
    _
  // Predicated region
  $region22: #{discriminator_forward.6} parent=0 // pred_check
    _
  $region23: #{discriminator_forward.6} parent=0 // pred_check_branch
    %308 = sbr.rel (0) target = $region25
  $region24: #{discriminator_forward.6} parent=0 // pred_region
    _
  $region25: #{discriminator_forward.6} parent=0 // pred_fallthru
    _

// kernel: discriminator_forward.7
$region0: #{discriminator_forward.7}
  #allocation0 [shape = 'u32[]', space=smem, size = 0x4, offset = 0x4, fixed_abs, tag = 'smem constant byte address 0x4 - core index']
  #allocation1 [shape = 'u32[144,128]{1,0:T(1,128)}', space=vmem, size = 0x12000, scoped, tag = 'internal scratch']
  %s0 = inlined_call_operand.vmem [shape: bf16[16,512], index: 0, kind: input, shape index: {}]
  %s1 = inlined_call_operand.vmem [shape: bf16[512,128], index: 1, kind: input, shape index: {}]
  %s2 = inlined_call_operand.vmem [shape: f32[16,128], index: 2, kind: output, shape index: {}]
  %s3 = sld [smem:[#allocation0]]
  $region18: #{discriminator_forward.7} parent=0
    _
  %s5 = ssub.s32 1, %s3
  %s6 = scalar_select 0, %s5, %s3
  // Predicated region
  $region2: #{discriminator_forward.7} parent=0 // pred_check
    _
  $region3: #{discriminator_forward.7} parent=0 // pred_check_branch
    %8 = sbr.rel (0) target = $region5
  $region4: #{discriminator_forward.7} parent=0 // pred_region
    _
  $region5: #{discriminator_forward.7} parent=0 // pred_fallthru
    _
  // Predicated region
  $region6: #{discriminator_forward.7} parent=0 // pred_check
    _
  $region7: #{discriminator_forward.7} parent=0 // pred_check_branch
    %10 = sbr.rel (0) target = $region9
  $region8: #{discriminator_forward.7} parent=0 // pred_region
    _
  $region9: #{discriminator_forward.7} parent=0 // pred_fallthru
    _
  %v12 = vld [vmem:[%s0] sm:$0xff]
  %v13 = vld [vmem:[%s0 + $0x8] sm:$0xff]
  %v14 = vld [vmem:[%s0 + $0x10] sm:$0xff]
  %v15 = vld [vmem:[%s0 + $0x18] sm:$0xff]
  %v16 = vld [vmem:[%s1] sm:$0xf]
  %v17 = vld [vmem:[%s1 + $0x4] sm:$0xf]
  %v18 = vld [vmem:[%s1 + $0x8] sm:$0xf]
  %v19 = vld [vmem:[%s1 + $0xc] sm:$0xf]
  %v20 = vld [vmem:[%s1 + $0x10] sm:$0xf]
  %v21 = vld [vmem:[%s1 + $0x14] sm:$0xf]
  %v22 = vld [vmem:[%s1 + $0x18] sm:$0xf]
  %v23 = vld [vmem:[%s1 + $0x1c] sm:$0xf]
  %v24 = vld [vmem:[%s1 + $0x20] sm:$0xf]
  %v25 = vld [vmem:[%s1 + $0x24] sm:$0xf]
  %v26 = vld [vmem:[%s1 + $0x28] sm:$0xf]
  %v27 = vld [vmem:[%s1 + $0x2c] sm:$0xf]
  %v28 = vld [vmem:[%s1 + $0x30] sm:$0xf]
  %v29 = vld [vmem:[%s1 + $0x34] sm:$0xf]
  %v30 = vld [vmem:[%s1 + $0x38] sm:$0xf]
  %v31 = vld [vmem:[%s1 + $0x3c] sm:$0xf]
  %v32 = vld [vmem:[%s1 + $0x40] sm:$0xf]
  %v33 = vld [vmem:[%s1 + $0x44] sm:$0xf]
  %v34 = vld [vmem:[%s1 + $0x48] sm:$0xf]
  %v35 = vld [vmem:[%s1 + $0x4c] sm:$0xf]
  %v36 = vld [vmem:[%s1 + $0x50] sm:$0xf]
  %v37 = vld [vmem:[%s1 + $0x54] sm:$0xf]
  %v38 = vld [vmem:[%s1 + $0x58] sm:$0xf]
  %v39 = vld [vmem:[%s1 + $0x5c] sm:$0xf]
  %v40 = vld [vmem:[%s1 + $0x60] sm:$0xf]
  %v41 = vld [vmem:[%s1 + $0x64] sm:$0xf]
  %v42 = vld [vmem:[%s1 + $0x68] sm:$0xf]
  %v43 = vld [vmem:[%s1 + $0x6c] sm:$0xf]
  %v44 = vld [vmem:[%s1 + $0x70] sm:$0xf]
  %v45 = vld [vmem:[%s1 + $0x74] sm:$0xf]
  %v46 = vld [vmem:[%s1 + $0x78] sm:$0xf]
  %v47 = vld [vmem:[%s1 + $0x7c] sm:$0xf]
  %v48 = vld [vmem:[%s1 + $0x80] sm:$0xf]
  %v49 = vld [vmem:[%s1 + $0x84] sm:$0xf]
  %v50 = vld [vmem:[%s1 + $0x88] sm:$0xf]
  %v51 = vld [vmem:[%s1 + $0x8c] sm:$0xf]
  %v52 = vld [vmem:[%s1 + $0x90] sm:$0xf]
  %v53 = vld [vmem:[%s1 + $0x94] sm:$0xf]
  %v54 = vld [vmem:[%s1 + $0x98] sm:$0xf]
  %v55 = vld [vmem:[%s1 + $0x9c] sm:$0xf]
  %v56 = vld [vmem:[%s1 + $0xa0] sm:$0xf]
  %v57 = vld [vmem:[%s1 + $0xa4] sm:$0xf]
  %v58 = vld [vmem:[%s1 + $0xa8] sm:$0xf]
  %v59 = vld [vmem:[%s1 + $0xac] sm:$0xf]
  %v60 = vld [vmem:[%s1 + $0xb0] sm:$0xf]
  %v61 = vld [vmem:[%s1 + $0xb4] sm:$0xf]
  %v62 = vld [vmem:[%s1 + $0xb8] sm:$0xf]
  %v63 = vld [vmem:[%s1 + $0xbc] sm:$0xf]
  %v64 = vld [vmem:[%s1 + $0xc0] sm:$0xf]
  %v65 = vld [vmem:[%s1 + $0xc4] sm:$0xf]
  %v66 = vld [vmem:[%s1 + $0xc8] sm:$0xf]
  %v67 = vld [vmem:[%s1 + $0xcc] sm:$0xf]
  %v68 = vld [vmem:[%s1 + $0xd0] sm:$0xf]
  %v69 = vld [vmem:[%s1 + $0xd4] sm:$0xf]
  %v70 = vld [vmem:[%s1 + $0xd8] sm:$0xf]
  %v71 = vld [vmem:[%s1 + $0xdc] sm:$0xf]
  %v72 = vld [vmem:[%s1 + $0xe0] sm:$0xf]
  %v73 = vld [vmem:[%s1 + $0xe4] sm:$0xf]
  %v74 = vld [vmem:[%s1 + $0xe8] sm:$0xf]
  %v75 = vld [vmem:[%s1 + $0xec] sm:$0xf]
  %v76 = vld [vmem:[%s1 + $0xf0] sm:$0xf]
  %v77 = vld [vmem:[%s1 + $0xf4] sm:$0xf]
  %v78 = vld [vmem:[%s1 + $0xf8] sm:$0xf]
  %v79 = vld [vmem:[%s1 + $0xfc] sm:$0xf]
  %v84 = vunpack.c.l.b16 %v12
  %v85 = vunpack.c.h.b16 %v12
  %v86 = vunpack.c.l.b16 %v13
  %v87 = vunpack.c.h.b16 %v13
  %v88 = vunpack.c.l.b16 %v14
  %v89 = vunpack.c.h.b16 %v14
  %v90 = vunpack.c.l.b16 %v15
  %v91 = vunpack.c.h.b16 %v15
  %v92 = vpack.c.b16 %v88, %v84
  %v93 = vpack.c.b16 %v89, %v85
  %v94 = vpack.c.b16 %v90, %v86
  %v95 = vpack.c.b16 %v91, %v87
  %v164 = vunpack.c.l.b16 %v16
  %v165 = vunpack.c.l.b16 %v17
  %v166 = vunpack.c.l.b16 %v18
  %v167 = vunpack.c.l.b16 %v19
  %v168 = vunpack.c.l.b16 %v20
  %v169 = vunpack.c.l.b16 %v21
  %v170 = vunpack.c.l.b16 %v22
  %v171 = vunpack.c.l.b16 %v23
  %v172 = vunpack.c.l.b16 %v24
  %v173 = vunpack.c.l.b16 %v25
  %v174 = vunpack.c.l.b16 %v26
  %v175 = vunpack.c.l.b16 %v27
  %v176 = vunpack.c.l.b16 %v28
  %v177 = vunpack.c.l.b16 %v29
  %v178 = vunpack.c.l.b16 %v30
  %v179 = vunpack.c.l.b16 %v31
  %v180 = vunpack.c.l.b16 %v32
  %v181 = vunpack.c.l.b16 %v33
  %v182 = vunpack.c.l.b16 %v34
  %v183 = vunpack.c.l.b16 %v35
  %v184 = vunpack.c.l.b16 %v36
  %v185 = vunpack.c.l.b16 %v37
  %v186 = vunpack.c.l.b16 %v38
  %v187 = vunpack.c.l.b16 %v39
  %v188 = vunpack.c.l.b16 %v40
  %v189 = vunpack.c.l.b16 %v41
  %v190 = vunpack.c.l.b16 %v42
  %v191 = vunpack.c.l.b16 %v43
  %v192 = vunpack.c.l.b16 %v44
  %v193 = vunpack.c.l.b16 %v45
  %v194 = vunpack.c.l.b16 %v46
  %v195 = vunpack.c.l.b16 %v47
  %v196 = vunpack.c.l.b16 %v48
  %v197 = vunpack.c.l.b16 %v49
  %v198 = vunpack.c.l.b16 %v50
  %v199 = vunpack.c.l.b16 %v51
  %v200 = vunpack.c.l.b16 %v52
  %v201 = vunpack.c.l.b16 %v53
  %v202 = vunpack.c.l.b16 %v54
  %v203 = vunpack.c.l.b16 %v55
  %v204 = vunpack.c.l.b16 %v56
  %v205 = vunpack.c.l.b16 %v57
  %v206 = vunpack.c.l.b16 %v58
  %v207 = vunpack.c.l.b16 %v59
  %v208 = vunpack.c.l.b16 %v60
  %v209 = vunpack.c.l.b16 %v61
  %v210 = vunpack.c.l.b16 %v62
  %v211 = vunpack.c.l.b16 %v63
  %v212 = vunpack.c.l.b16 %v64
  %v213 = vunpack.c.l.b16 %v65
  %v214 = vunpack.c.l.b16 %v66
  %v215 = vunpack.c.l.b16 %v67
  %v216 = vunpack.c.l.b16 %v68
  %v217 = vunpack.c.l.b16 %v69
  %v218 = vunpack.c.l.b16 %v70
  %v219 = vunpack.c.l.b16 %v71
  %v220 = vunpack.c.l.b16 %v72
  %v221 = vunpack.c.l.b16 %v73
  %v222 = vunpack.c.l.b16 %v74
  %v223 = vunpack.c.l.b16 %v75
  %v224 = vunpack.c.l.b16 %v76
  %v225 = vunpack.c.l.b16 %v77
  %v226 = vunpack.c.l.b16 %v78
  %v227 = vunpack.c.l.b16 %v79
  %v228 = vpack.c.b16 %v165, %v164
  %v229 = vpack.c.b16 %v167, %v166
  %v230 = vpack.c.b16 %v169, %v168
  %v231 = vpack.c.b16 %v171, %v170
  %v232 = vpack.c.b16 %v173, %v172
  %v233 = vpack.c.b16 %v175, %v174
  %v234 = vpack.c.b16 %v177, %v176
  %v235 = vpack.c.b16 %v179, %v178
  %v236 = vpack.c.b16 %v181, %v180
  %v237 = vpack.c.b16 %v183, %v182
  %v238 = vpack.c.b16 %v185, %v184
  %v239 = vpack.c.b16 %v187, %v186
  %v240 = vpack.c.b16 %v189, %v188
  %v241 = vpack.c.b16 %v191, %v190
  %v242 = vpack.c.b16 %v193, %v192
  %v243 = vpack.c.b16 %v195, %v194
  %v244 = vpack.c.b16 %v197, %v196
  %v245 = vpack.c.b16 %v199, %v198
  %v246 = vpack.c.b16 %v201, %v200
  %v247 = vpack.c.b16 %v203, %v202
  %v248 = vpack.c.b16 %v205, %v204
  %v249 = vpack.c.b16 %v207, %v206
  %v250 = vpack.c.b16 %v209, %v208
  %v251 = vpack.c.b16 %v211, %v210
  %v252 = vpack.c.b16 %v213, %v212
  %v253 = vpack.c.b16 %v215, %v214
  %v254 = vpack.c.b16 %v217, %v216
  %v255 = vpack.c.b16 %v219, %v218
  %v256 = vpack.c.b16 %v221, %v220
  %v257 = vpack.c.b16 %v223, %v222
  %v258 = vpack.c.b16 %v225, %v224
  %v259 = vpack.c.b16 %v227, %v226
  %292 = vmatprep.subr.bf16.mxu0 0
  %293 = vmatpush1.bf16.msra.mxu0 %v228
  %294 = vmatprep.subr.bf16.mxu0 0
  %295 = vmatpush1.bf16.msra.mxu0 %v229
  %296 = vmatprep.subr.bf16.mxu0 0
  %297 = vmatpush1.bf16.msra.mxu0 %v230
  %298 = vmatprep.subr.bf16.mxu0 0
  %299 = vmatpush1.bf16.msra.mxu0 %v231
  %300 = vmatprep.subr.bf16.mxu0 0
  %301 = vmatpush1.bf16.msra.mxu0 %v232
  %302 = vmatprep.subr.bf16.mxu0 0
  %303 = vmatpush1.bf16.msra.mxu0 %v233
  %304 = vmatprep.subr.bf16.mxu0 0
  %305 = vmatpush1.bf16.msra.mxu0 %v234
  %306 = vmatprep.subr.bf16.mxu0 0
  %307 = vmatpush1.bf16.msra.mxu0 %v235
  %308 = vmatprep.subr.bf16.mxu0 0
  %309 = vmatpush1.bf16.msra.mxu0 %v236
  %310 = vmatprep.subr.bf16.mxu0 0
  %311 = vmatpush1.bf16.msra.mxu0 %v237
  %312 = vmatprep.subr.bf16.mxu0 0
  %313 = vmatpush1.bf16.msra.mxu0 %v238
  %314 = vmatprep.subr.bf16.mxu0 0
  %315 = vmatpush1.bf16.msra.mxu0 %v239
  %316 = vmatprep.subr.bf16.mxu0 0
  %317 = vmatpush1.bf16.msra.mxu0 %v240
  %318 = vmatprep.subr.bf16.mxu0 0
  %319 = vmatpush1.bf16.msra.mxu0 %v241
  %320 = vmatprep.subr.bf16.mxu0 0
  %321 = vmatpush1.bf16.msra.mxu0 %v242
  %322 = vmatprep.subr.bf16.mxu0 0
  %323 = vmatpush1.bf16.msra.mxu0 %v243
  %324 = vmatprep.mubr.bf16.mxu0 %v93
  %325 = vmatmul.mubr.bf16.gmra.mrb[0].mxu0 %v92
  %v326 = vpop.f32.mrb[0].mxu0
  %v327 = vadd.f32 0.0, %v326
  %v328 = vpop.f32.mrb[0].mxu0
  %v329 = vpop.f32.mrb[0].mxu0
  %v330 = vadd.f32 0.0, %v329
  %v331 = vpop.f32.mrb[0].mxu0
  %332 = vdwg.mxu0
  %333 = vmatprep.subr.bf16.mxu0 0
  %334 = vmatpush1.bf16.msra.mxu0 %v244
  %335 = vmatprep.subr.bf16.mxu0 0
  %336 = vmatpush1.bf16.msra.mxu0 %v245
  %337 = vmatprep.subr.bf16.mxu0 0
  %338 = vmatpush1.bf16.msra.mxu0 %v246
  %339 = vmatprep.subr.bf16.mxu0 0
  %340 = vmatpush1.bf16.msra.mxu0 %v247
  %341 = vmatprep.subr.bf16.mxu0 0
  %342 = vmatpush1.bf16.msra.mxu0 %v248
  %343 = vmatprep.subr.bf16.mxu0 0
  %344 = vmatpush1.bf16.msra.mxu0 %v249
  %345 = vmatprep.subr.bf16.mxu0 0
  %346 = vmatpush1.bf16.msra.mxu0 %v250
  %347 = vmatprep.subr.bf16.mxu0 0
  %348 = vmatpush1.bf16.msra.mxu0 %v251
  %349 = vmatprep.subr.bf16.mxu0 0
  %350 = vmatpush1.bf16.msra.mxu0 %v252
  %351 = vmatprep.subr.bf16.mxu0 0
  %352 = vmatpush1.bf16.msra.mxu0 %v253
  %353 = vmatprep.subr.bf16.mxu0 0
  %354 = vmatpush1.bf16.msra.mxu0 %v254
  %355 = vmatprep.subr.bf16.mxu0 0
  %356 = vmatpush1.bf16.msra.mxu0 %v255
  %357 = vmatprep.subr.bf16.mxu0 0
  %358 = vmatpush1.bf16.msra.mxu0 %v256
  %359 = vmatprep.subr.bf16.mxu0 0
  %360 = vmatpush1.bf16.msra.mxu0 %v257
  %361 = vmatprep.subr.bf16.mxu0 0
  %362 = vmatpush1.bf16.msra.mxu0 %v258
  %363 = vmatprep.subr.bf16.mxu0 0
  %364 = vmatpush1.bf16.msra.mxu0 %v259
  %365 = vmatprep.mubr.bf16.mxu0 %v95
  %366 = vmatmul.mubr.bf16.gmra.mrb[0].mxu0 %v94
  %v367 = vpop.f32.mrb[0].mxu0
  %v368 = vadd.f32 %v327, %v367
  %v369 = vpop.f32.mrb[0].mxu0
  %v370 = vpop.f32.mrb[0].mxu0
  %v371 = vadd.f32 %v330, %v370
  %v372 = vpop.f32.mrb[0].mxu0
  %373 = vdwg.mxu0
  %v374 = vand.u32 2147483647, %v368
  %v375 = vand.u32 2147483647, %v371
  %v376 = vsub.f32 0.0, %v374
  %v377 = vsub.f32 0.0, %v375
  %v378 = vmul.f32 %v376, 1.442695
  %v379 = vpow.pop %v378
  %v380 = vmul.f32 %v377, 1.442695
  %v381 = vpow.pop %v380
  %vm382 = vcmp.ge.f32.partialorder %v368, 0.0
  %vm383 = vcmp.ge.f32.partialorder %v371, 0.0
  %v384 = vsel %vm382, 1.0, %v379
  %v385 = vsel %vm383, 1.0, %v381
  %v386 = vadd.f32 %v379, 1.0
  %v387 = vadd.f32 %v381, 1.0
  %v388 = vrcp.pop %v386
  %v389 = vrcp.pop %v387
  %v390 = vmul.f32 %v384, %v388
  %v391 = vmul.f32 %v385, %v389
  %v392 = vmin.f32 %v390, 1.0
  %v393 = vmin.f32 %v391, 1.0
  %394 = vst [vmem:[%s2] sm:$0xff] %v392
  %395 = vst [vmem:[%s2 + $0x8] sm:$0xff] %v393
  // Predicated region
  $region10: #{discriminator_forward.7} parent=0 // pred_check
    _
  $region11: #{discriminator_forward.7} parent=0 // pred_check_branch
    %397 = sbr.rel (0) target = $region13
  $region12: #{discriminator_forward.7} parent=0 // pred_region
    _
  $region13: #{discriminator_forward.7} parent=0 // pred_fallthru
    _
  // Predicated region
  $region14: #{discriminator_forward.7} parent=0 // pred_check
    _
  $region15: #{discriminator_forward.7} parent=0 // pred_check_branch
    %399 = sbr.rel (0) target = $region17
  $region16: #{discriminator_forward.7} parent=0 // pred_region
    _
  $region17: #{discriminator_forward.7} parent=0 // pred_fallthru
    _

</llo_original>
